<compile_context>
chip_gen: v7x
topology: tpu7x:2x2x1
jax: 0.10.0
libtpu: 0.0.40
codegen_flags: <defaults>
</compile_context>

<pallas_src>
import jax
import jax.numpy as jnp
from jax.experimental import pallas as pl
from jax.experimental.pallas import tpu as pltpu


def decoder_gru_kernel(x_ref, h0_ref, wih_ref, whh_ref, bih_ref, bhh_ref,
                       wout_ref, bout_ref, out_ref, hn_ref, gates_ref, hs_ref):
    B, H = h0_ref.shape
    T = x_ref.shape[0] // B

    # ---- Phase 1: ReLU(embedding) + all input-to-hidden gates in one matmul.
    x = jnp.maximum(x_ref[...], 0.0)                                   # (T*B, F)
    gates_ref[...] = (jnp.dot(x, wih_ref[...],
                              preferred_element_type=jnp.float32)
                      + bih_ref[...])                                  # (T*B, 3H)

    # ---- Phase 2: sequential GRU recurrence (fused gate weights, 1 matmul/step).
    whh = whh_ref[...]                                                 # (H, 3H)
    bhh = bhh_ref[...]                                                 # (1, 3H)

    def step(t, h_prev):
        off = pl.multiple_of(t * B, B)
        g_ih = gates_ref[pl.ds(off, B), :]                             # (B, 3H)
        g_hh = jnp.dot(h_prev, whh, preferred_element_type=jnp.float32) + bhh
        # PyTorch GRU gate order: r, z, n (static lane slices of the fused gates)
        r = jax.nn.sigmoid(g_ih[:, 0:H] + g_hh[:, 0:H])
        z = jax.nn.sigmoid(g_ih[:, H:2 * H] + g_hh[:, H:2 * H])
        n = jnp.tanh(g_ih[:, 2 * H:3 * H] + r * g_hh[:, 2 * H:3 * H])
        h = (1.0 - z) * n + z * h_prev
        hs_ref[pl.ds(off, B), :] = h
        return h

    h_last = jax.lax.fori_loop(0, T, step, h0_ref[...], unroll=True)
    hn_ref[...] = h_last

    # ---- Phase 3: output projection + log_softmax over all timesteps at once.
    hs = hs_ref[...]                                                   # (T*B, H)
    logits = (jnp.dot(hs, wout_ref[...], preferred_element_type=jnp.float32)
              + bout_ref[...])                                         # (T*B, O_pad)
    m = jnp.max(logits, axis=-1, keepdims=True)
    lse = jnp.log(jnp.sum(jnp.exp(logits - m), axis=-1, keepdims=True)) + m
    out_ref[...] = logits - lse                                        # lane-dense store


def decoder_rnn_forward(token_ids, hidden, params):
    """token_ids: (B, T) int32, hidden: (1, B, H) f32. Returns (logp, hn, zeros)."""
    B, T = token_ids.shape
    F = params["embedding"].shape[1]
    H = hidden.shape[-1]
    O = params["w_out"].shape[-1]
    # Module applies nn.Linear(featureSize, outputSize) to the GRU output ->
    # hiddenSize must equal featureSize for the original module to work.
    assert F == H, "DecoderRNN requires featureSize == hiddenSize"

    # Embedding gather done directly in time-major order -> no extra HBM transpose.
    emb = params["embedding"][token_ids.T].astype(jnp.float32)         # (T, B, F)
    x2d = emb.reshape(T * B, F)                                        # row = t*B + b

    # Pad output dim to a multiple of 128 for a fully lane-dense store; padded
    # columns get zero weights and a huge negative bias so they vanish under
    # log_softmax, then get sliced off in the wrapper.
    O_pad = max(128, ((O + 127) // 128) * 128)
    w_out = params["w_out"]
    b_out = params["b_out"]
    if O_pad != O:
        w_out = jnp.pad(w_out, ((0, 0), (0, O_pad - O)))
        b_out = jnp.pad(b_out, ((0, 0), (0, O_pad - O)), constant_values=-1e30)

    h0 = hidden[0].astype(jnp.float32)                                 # (B, H)

    vmem = pl.BlockSpec(memory_space=pltpu.MemorySpace.VMEM)

    out2d, hn = pl.pallas_call(
        decoder_gru_kernel,
        out_shape=(jax.ShapeDtypeStruct((T * B, O_pad), jnp.float32),
                   jax.ShapeDtypeStruct((B, H), jnp.float32)),
        in_specs=[vmem] * 8,
        out_specs=(vmem, vmem),
        scratch_shapes=[
            pltpu.VMEM((T * B, 3 * H), jnp.float32),   # precomputed ih gates
            pltpu.VMEM((T * B, H), jnp.float32),       # all hidden states
        ],
    )(x2d, h0, params["w_ih"], params["w_hh"], params["b_ih"], params["b_hh"],
      w_out, b_out)

    logp = jnp.transpose(out2d.reshape(T, B, O_pad)[:, :, :O], (1, 0, 2))  # (B, T, O)
    hn_out = hn[None]                                                  # (1, B, H)
    zeros = jnp.zeros((B, 1, T), dtype=jnp.float32)                    # torch.zeros([B,1,T])
    return logp, hn_out, zeros


def ref_forward(token_ids, hidden, params):
    """Pure-JAX reference matching PyTorch semantics (fused r|z|n gate layout)."""
    emb = params["embedding"][token_ids]
    x = jnp.maximum(emb, 0.0)
    h0 = hidden[0]
    H = h0.shape[-1]

    def step(h, xt):
        gi = xt @ params["w_ih"] + params["b_ih"][0]
        gh = h @ params["w_hh"] + params["b_hh"][0]
        r = jax.nn.sigmoid(gi[:, :H] + gh[:, :H])
        z = jax.nn.sigmoid(gi[:, H:2 * H] + gh[:, H:2 * H])
        n = jnp.tanh(gi[:, 2 * H:] + r * gh[:, 2 * H:])
        hn = (1.0 - z) * n + z * h
        return hn, hn

    hT, hs = jax.lax.scan(step, h0, jnp.transpose(x, (1, 0, 2)))
    out = jnp.transpose(hs, (1, 0, 2)) @ params["w_out"] + params["b_out"][0]
    logp = jax.nn.log_softmax(out, axis=2)
    return logp, hT[None], jnp.zeros((x.shape[0], 1, x.shape[1]), jnp.float32)


def make_params(key, vocab, feature, hidden, output):
    ks = jax.random.split(key, 7)
    s = 1.0 / jnp.sqrt(hidden)
    return {
        "embedding": jax.random.normal(ks[0], (vocab, feature), jnp.float32) * 0.1,
        # fused gate weights, pre-transposed for x @ W; lane order [ r | z | n ]
        "w_ih": jax.random.uniform(ks[1], (feature, 3 * hidden), jnp.float32, -s, s),
        "w_hh": jax.random.uniform(ks[2], (hidden, 3 * hidden), jnp.float32, -s, s),
        "b_ih": jax.random.uniform(ks[3], (1, 3 * hidden), jnp.float32, -s, s),
        "b_hh": jax.random.uniform(ks[4], (1, 3 * hidden), jnp.float32, -s, s),
        "w_out": jax.random.uniform(ks[5], (hidden, output), jnp.float32, -s, s),
        "b_out": jax.random.uniform(ks[6], (1, output), jnp.float32, -s, s),
    }


if __name__ == "__main__":
    B, T = 2, 8
    FEATURE = HIDDEN = 32     # module requires featureSize == hiddenSize
    VOCAB, OUTPUT = 50, 64

    key = jax.random.PRNGKey(0)
    kp, kt, kh = jax.random.split(key, 3)
    params = make_params(kp, VOCAB, FEATURE, HIDDEN, OUTPUT)
    token_ids = jax.random.randint(kt, (B, T), 0, VOCAB, dtype=jnp.int32)
    hidden0 = jax.random.normal(kh, (1, B, HIDDEN), jnp.float32)

    logp, hn, zeros = jax.block_until_ready(
        decoder_rnn_forward(token_ids, hidden0, params))

    # correctness check against pure-JAX reference
    r_logp, r_hn, r_zeros = ref_forward(token_ids, hidden0, params)
    assert logp.shape == (B, T, OUTPUT) and hn.shape == (1, B, HIDDEN) and zeros.shape == (B, 1, T)
    assert jnp.allclose(logp, r_logp, atol=2e-3, rtol=2e-3)
    assert jnp.allclose(hn, r_hn, atol=2e-3, rtol=2e-3)
    assert jnp.all(zeros == 0.0)

    print("KERNEL_OK")
</pallas_src>

<mosaic_0001>
module attributes {stable_mosaic.version = 11 : i64} {
  func.func @decoder_gru_kernel(%arg0: memref<16x32xf32, #tpu.memory_space<vmem>>, %arg1: memref<2x32xf32, #tpu.memory_space<vmem>>, %arg2: memref<32x96xf32, #tpu.memory_space<vmem>>, %arg3: memref<32x96xf32, #tpu.memory_space<vmem>>, %arg4: memref<1x96xf32, #tpu.memory_space<vmem>>, %arg5: memref<1x96xf32, #tpu.memory_space<vmem>>, %arg6: memref<32x128xf32, #tpu.memory_space<vmem>>, %arg7: memref<1x128xf32, #tpu.memory_space<vmem>>, %arg8: memref<16x128xf32, #tpu.memory_space<vmem>>, %arg9: memref<2x32xf32, #tpu.memory_space<vmem>>, %arg10: memref<16x96xf32, #tpu.memory_space<vmem>>, %arg11: memref<16x32xf32, #tpu.memory_space<vmem>>) attributes {dimension_semantics = [], scalar_prefetch = 0 : i64, scratch_operands = 2 : i64, tpu.core_type = #tpu.core_type<tc>} {
    %c0 = arith.constant 0 : index
    %c0_0 = arith.constant 0 : index
    %0 = vector.load %arg0[%c0, %c0_0] : memref<16x32xf32, #tpu.memory_space<vmem>>, vector<16x32xf32>
    %cst = arith.constant 0.000000e+00 : f32
    %1 = vector.broadcast %cst : f32 to vector<16x32xf32>
    %2 = arith.maximumf %0, %1 : vector<16x32xf32>
    %c0_1 = arith.constant 0 : index
    %c0_2 = arith.constant 0 : index
    %3 = vector.load %arg2[%c0_1, %c0_2] : memref<32x96xf32, #tpu.memory_space<vmem>>, vector<32x96xf32>
    %cst_3 = arith.constant dense<0.000000e+00> : vector<16x96xf32>
    %4 = tpu.matmul %2, %3, %cst_3 {dimension_numbers = #tpu.dot_dimension_numbers<[1], [0], [0], [1], [0, 0, 1, 1], [], []>} : vector<16x32xf32>, vector<32x96xf32>, vector<16x96xf32> -> vector<16x96xf32>
    %c0_4 = arith.constant 0 : index
    %c0_5 = arith.constant 0 : index
    %5 = vector.load %arg4[%c0_4, %c0_5] : memref<1x96xf32, #tpu.memory_space<vmem>>, vector<1x96xf32>
    %6 = vector.broadcast %5 : vector<1x96xf32> to vector<16x96xf32>
    %7 = arith.addf %4, %6 : vector<16x96xf32>
    %c0_6 = arith.constant 0 : index
    %c0_7 = arith.constant 0 : index
    %8 = vector.load %arg10[%c0_6, %c0_7] : memref<16x96xf32, #tpu.memory_space<vmem>>, vector<16x96xf32>
    tpu.vector_store %arg10[%c0_6, %c0_7], %7 {strides = array<i32>} : memref<16x96xf32, #tpu.memory_space<vmem>>, vector<16x96xf32>,
    %c0_8 = arith.constant 0 : index
    %c0_9 = arith.constant 0 : index
    %9 = vector.load %arg3[%c0_8, %c0_9] : memref<32x96xf32, #tpu.memory_space<vmem>>, vector<32x96xf32>
    %c0_10 = arith.constant 0 : index
    %c0_11 = arith.constant 0 : index
    %10 = vector.load %arg5[%c0_10, %c0_11] : memref<1x96xf32, #tpu.memory_space<vmem>>, vector<1x96xf32>
    %c0_12 = arith.constant 0 : index
    %c0_13 = arith.constant 0 : index
    %11 = vector.load %arg1[%c0_12, %c0_13] : memref<2x32xf32, #tpu.memory_space<vmem>>, vector<2x32xf32>
    %c0_i32 = arith.constant 0 : i32
    %c2_i32 = arith.constant 2 : i32
    %12 = arith.muli %c0_i32, %c2_i32 : i32
    %13 = tpu.assume_multiple %12, 2 : i32
    %14 = arith.index_cast %13 : i32 to index
    %c0_14 = arith.constant 0 : index
    %15 = vector.load %arg10[%14, %c0_14] : memref<16x96xf32, #tpu.memory_space<vmem>>, vector<2x96xf32>
    %cst_15 = arith.constant dense<0.000000e+00> : vector<2x96xf32>
    %16 = tpu.matmul %11, %9, %cst_15 {dimension_numbers = #tpu.dot_dimension_numbers<[1], [0], [0], [1], [0, 0, 1, 1], [], []>} : vector<2x32xf32>, vector<32x96xf32>, vector<2x96xf32> -> vector<2x96xf32>
    %17 = vector.broadcast %10 : vector<1x96xf32> to vector<2x96xf32>
    %18 = arith.addf %16, %17 : vector<2x96xf32>
    %19 = vector.extract_strided_slice %15 {offsets = [0, 0], sizes = [2, 32], strides = [1, 1]} : vector<2x96xf32> to vector<2x32xf32>
    %20 = vector.extract_strided_slice %18 {offsets = [0, 0], sizes = [2, 32], strides = [1, 1]} : vector<2x96xf32> to vector<2x32xf32>
    %21 = arith.addf %19, %20 : vector<2x32xf32>
    %22 = arith.negf %21 : vector<2x32xf32>
    %23 = math.exp %22 : vector<2x32xf32>
    %cst_16 = arith.constant 1.000000e+00 : f32
    %24 = vector.broadcast %cst_16 : f32 to vector<2x32xf32>
    %25 = arith.addf %24, %23 : vector<2x32xf32>
    %26 = arith.divf %24, %25 : vector<2x32xf32>
    %27 = vector.extract_strided_slice %15 {offsets = [0, 32], sizes = [2, 32], strides = [1, 1]} : vector<2x96xf32> to vector<2x32xf32>
    %28 = vector.extract_strided_slice %18 {offsets = [0, 32], sizes = [2, 32], strides = [1, 1]} : vector<2x96xf32> to vector<2x32xf32>
    %29 = arith.addf %27, %28 : vector<2x32xf32>
    %30 = arith.negf %29 : vector<2x32xf32>
    %31 = math.exp %30 : vector<2x32xf32>
    %cst_17 = arith.constant 1.000000e+00 : f32
    %32 = vector.broadcast %cst_17 : f32 to vector<2x32xf32>
    %33 = arith.addf %32, %31 : vector<2x32xf32>
    %34 = arith.divf %32, %33 : vector<2x32xf32>
    %35 = vector.extract_strided_slice %15 {offsets = [0, 64], sizes = [2, 32], strides = [1, 1]} : vector<2x96xf32> to vector<2x32xf32>
    %36 = vector.extract_strided_slice %18 {offsets = [0, 64], sizes = [2, 32], strides = [1, 1]} : vector<2x96xf32> to vector<2x32xf32>
    %37 = arith.mulf %26, %36 : vector<2x32xf32>
    %38 = arith.addf %35, %37 : vector<2x32xf32>
    %39 = math.tanh %38 : vector<2x32xf32>
    %cst_18 = arith.constant 1.000000e+00 : f32
    %40 = vector.broadcast %cst_18 : f32 to vector<2x32xf32>
    %41 = arith.subf %40, %34 : vector<2x32xf32>
    %42 = arith.mulf %41, %39 : vector<2x32xf32>
    %43 = arith.mulf %34, %11 : vector<2x32xf32>
    %44 = arith.addf %42, %43 : vector<2x32xf32>
    %45 = arith.index_cast %13 : i32 to index
    %c0_19 = arith.constant 0 : index
    %46 = vector.load %arg11[%45, %c0_19] : memref<16x32xf32, #tpu.memory_space<vmem>>, vector<2x32xf32>
    tpu.vector_store %arg11[%45, %c0_19], %44 {strides = array<i32>} : memref<16x32xf32, #tpu.memory_space<vmem>>, vector<2x32xf32>,
    %c1_i32 = arith.constant 1 : i32
    %c2_i32_20 = arith.constant 2 : i32
    %47 = arith.muli %c1_i32, %c2_i32_20 : i32
    %48 = tpu.assume_multiple %47, 2 : i32
    %49 = arith.index_cast %48 : i32 to index
    %c0_21 = arith.constant 0 : index
    %50 = vector.load %arg10[%49, %c0_21] : memref<16x96xf32, #tpu.memory_space<vmem>>, vector<2x96xf32>
    %cst_22 = arith.constant dense<0.000000e+00> : vector<2x96xf32>
    %51 = tpu.matmul %44, %9, %cst_22 {dimension_numbers = #tpu.dot_dimension_numbers<[1], [0], [0], [1], [0, 0, 1, 1], [], []>} : vector<2x32xf32>, vector<32x96xf32>, vector<2x96xf32> -> vector<2x96xf32>
    %52 = vector.broadcast %10 : vector<1x96xf32> to vector<2x96xf32>
    %53 = arith.addf %51, %52 : vector<2x96xf32>
    %54 = vector.extract_strided_slice %50 {offsets = [0, 0], sizes = [2, 32], strides = [1, 1]} : vector<2x96xf32> to vector<2x32xf32>
    %55 = vector.extract_strided_slice %53 {offsets = [0, 0], sizes = [2, 32], strides = [1, 1]} : vector<2x96xf32> to vector<2x32xf32>
    %56 = arith.addf %54, %55 : vector<2x32xf32>
    %57 = arith.negf %56 : vector<2x32xf32>
    %58 = math.exp %57 : vector<2x32xf32>
    %cst_23 = arith.constant 1.000000e+00 : f32
    %59 = vector.broadcast %cst_23 : f32 to vector<2x32xf32>
    %60 = arith.addf %59, %58 : vector<2x32xf32>
    %61 = arith.divf %59, %60 : vector<2x32xf32>
    %62 = vector.extract_strided_slice %50 {offsets = [0, 32], sizes = [2, 32], strides = [1, 1]} : vector<2x96xf32> to vector<2x32xf32>
    %63 = vector.extract_strided_slice %53 {offsets = [0, 32], sizes = [2, 32], strides = [1, 1]} : vector<2x96xf32> to vector<2x32xf32>
    %64 = arith.addf %62, %63 : vector<2x32xf32>
    %65 = arith.negf %64 : vector<2x32xf32>
    %66 = math.exp %65 : vector<2x32xf32>
    %cst_24 = arith.constant 1.000000e+00 : f32
    %67 = vector.broadcast %cst_24 : f32 to vector<2x32xf32>
    %68 = arith.addf %67, %66 : vector<2x32xf32>
    %69 = arith.divf %67, %68 : vector<2x32xf32>
    %70 = vector.extract_strided_slice %50 {offsets = [0, 64], sizes = [2, 32], strides = [1, 1]} : vector<2x96xf32> to vector<2x32xf32>
    %71 = vector.extract_strided_slice %53 {offsets = [0, 64], sizes = [2, 32], strides = [1, 1]} : vector<2x96xf32> to vector<2x32xf32>
    %72 = arith.mulf %61, %71 : vector<2x32xf32>
    %73 = arith.addf %70, %72 : vector<2x32xf32>
    %74 = math.tanh %73 : vector<2x32xf32>
    %cst_25 = arith.constant 1.000000e+00 : f32
    %75 = vector.broadcast %cst_25 : f32 to vector<2x32xf32>
    %76 = arith.subf %75, %69 : vector<2x32xf32>
    %77 = arith.mulf %76, %74 : vector<2x32xf32>
    %78 = arith.mulf %69, %44 : vector<2x32xf32>
    %79 = arith.addf %77, %78 : vector<2x32xf32>
    %80 = arith.index_cast %48 : i32 to index
    %c0_26 = arith.constant 0 : index
    %81 = vector.load %arg11[%80, %c0_26] : memref<16x32xf32, #tpu.memory_space<vmem>>, vector<2x32xf32>
    tpu.vector_store %arg11[%80, %c0_26], %79 {strides = array<i32>} : memref<16x32xf32, #tpu.memory_space<vmem>>, vector<2x32xf32>,
    %c2_i32_27 = arith.constant 2 : i32
    %c2_i32_28 = arith.constant 2 : i32
    %82 = arith.muli %c2_i32_27, %c2_i32_28 : i32
    %83 = tpu.assume_multiple %82, 2 : i32
    %84 = arith.index_cast %83 : i32 to index
    %c0_29 = arith.constant 0 : index
    %85 = vector.load %arg10[%84, %c0_29] : memref<16x96xf32, #tpu.memory_space<vmem>>, vector<2x96xf32>
    %cst_30 = arith.constant dense<0.000000e+00> : vector<2x96xf32>
    %86 = tpu.matmul %79, %9, %cst_30 {dimension_numbers = #tpu.dot_dimension_numbers<[1], [0], [0], [1], [0, 0, 1, 1], [], []>} : vector<2x32xf32>, vector<32x96xf32>, vector<2x96xf32> -> vector<2x96xf32>
    %87 = vector.broadcast %10 : vector<1x96xf32> to vector<2x96xf32>
    %88 = arith.addf %86, %87 : vector<2x96xf32>
    %89 = vector.extract_strided_slice %85 {offsets = [0, 0], sizes = [2, 32], strides = [1, 1]} : vector<2x96xf32> to vector<2x32xf32>
    %90 = vector.extract_strided_slice %88 {offsets = [0, 0], sizes = [2, 32], strides = [1, 1]} : vector<2x96xf32> to vector<2x32xf32>
    %91 = arith.addf %89, %90 : vector<2x32xf32>
    %92 = arith.negf %91 : vector<2x32xf32>
    %93 = math.exp %92 : vector<2x32xf32>
    %cst_31 = arith.constant 1.000000e+00 : f32
    %94 = vector.broadcast %cst_31 : f32 to vector<2x32xf32>
    %95 = arith.addf %94, %93 : vector<2x32xf32>
    %96 = arith.divf %94, %95 : vector<2x32xf32>
    %97 = vector.extract_strided_slice %85 {offsets = [0, 32], sizes = [2, 32], strides = [1, 1]} : vector<2x96xf32> to vector<2x32xf32>
    %98 = vector.extract_strided_slice %88 {offsets = [0, 32], sizes = [2, 32], strides = [1, 1]} : vector<2x96xf32> to vector<2x32xf32>
    %99 = arith.addf %97, %98 : vector<2x32xf32>
    %100 = arith.negf %99 : vector<2x32xf32>
    %101 = math.exp %100 : vector<2x32xf32>
    %cst_32 = arith.constant 1.000000e+00 : f32
    %102 = vector.broadcast %cst_32 : f32 to vector<2x32xf32>
    %103 = arith.addf %102, %101 : vector<2x32xf32>
    %104 = arith.divf %102, %103 : vector<2x32xf32>
    %105 = vector.extract_strided_slice %85 {offsets = [0, 64], sizes = [2, 32], strides = [1, 1]} : vector<2x96xf32> to vector<2x32xf32>
    %106 = vector.extract_strided_slice %88 {offsets = [0, 64], sizes = [2, 32], strides = [1, 1]} : vector<2x96xf32> to vector<2x32xf32>
    %107 = arith.mulf %96, %106 : vector<2x32xf32>
    %108 = arith.addf %105, %107 : vector<2x32xf32>
    %109 = math.tanh %108 : vector<2x32xf32>
    %cst_33 = arith.constant 1.000000e+00 : f32
    %110 = vector.broadcast %cst_33 : f32 to vector<2x32xf32>
    %111 = arith.subf %110, %104 : vector<2x32xf32>
    %112 = arith.mulf %111, %109 : vector<2x32xf32>
    %113 = arith.mulf %104, %79 : vector<2x32xf32>
    %114 = arith.addf %112, %113 : vector<2x32xf32>
    %115 = arith.index_cast %83 : i32 to index
    %c0_34 = arith.constant 0 : index
    %116 = vector.load %arg11[%115, %c0_34] : memref<16x32xf32, #tpu.memory_space<vmem>>, vector<2x32xf32>
    tpu.vector_store %arg11[%115, %c0_34], %114 {strides = array<i32>} : memref<16x32xf32, #tpu.memory_space<vmem>>, vector<2x32xf32>,
    %c3_i32 = arith.constant 3 : i32
    %c2_i32_35 = arith.constant 2 : i32
    %117 = arith.muli %c3_i32, %c2_i32_35 : i32
    %118 = tpu.assume_multiple %117, 2 : i32
    %119 = arith.index_cast %118 : i32 to index
    %c0_36 = arith.constant 0 : index
    %120 = vector.load %arg10[%119, %c0_36] : memref<16x96xf32, #tpu.memory_space<vmem>>, vector<2x96xf32>
    %cst_37 = arith.constant dense<0.000000e+00> : vector<2x96xf32>
    %121 = tpu.matmul %114, %9, %cst_37 {dimension_numbers = #tpu.dot_dimension_numbers<[1], [0], [0], [1], [0, 0, 1, 1], [], []>} : vector<2x32xf32>, vector<32x96xf32>, vector<2x96xf32> -> vector<2x96xf32>
    %122 = vector.broadcast %10 : vector<1x96xf32> to vector<2x96xf32>
    %123 = arith.addf %121, %122 : vector<2x96xf32>
    %124 = vector.extract_strided_slice %120 {offsets = [0, 0], sizes = [2, 32], strides = [1, 1]} : vector<2x96xf32> to vector<2x32xf32>
    %125 = vector.extract_strided_slice %123 {offsets = [0, 0], sizes = [2, 32], strides = [1, 1]} : vector<2x96xf32> to vector<2x32xf32>
    %126 = arith.addf %124, %125 : vector<2x32xf32>
    %127 = arith.negf %126 : vector<2x32xf32>
    %128 = math.exp %127 : vector<2x32xf32>
    %cst_38 = arith.constant 1.000000e+00 : f32
    %129 = vector.broadcast %cst_38 : f32 to vector<2x32xf32>
    %130 = arith.addf %129, %128 : vector<2x32xf32>
    %131 = arith.divf %129, %130 : vector<2x32xf32>
    %132 = vector.extract_strided_slice %120 {offsets = [0, 32], sizes = [2, 32], strides = [1, 1]} : vector<2x96xf32> to vector<2x32xf32>
    %133 = vector.extract_strided_slice %123 {offsets = [0, 32], sizes = [2, 32], strides = [1, 1]} : vector<2x96xf32> to vector<2x32xf32>
    %134 = arith.addf %132, %133 : vector<2x32xf32>
    %135 = arith.negf %134 : vector<2x32xf32>
    %136 = math.exp %135 : vector<2x32xf32>
    %cst_39 = arith.constant 1.000000e+00 : f32
    %137 = vector.broadcast %cst_39 : f32 to vector<2x32xf32>
    %138 = arith.addf %137, %136 : vector<2x32xf32>
    %139 = arith.divf %137, %138 : vector<2x32xf32>
    %140 = vector.extract_strided_slice %120 {offsets = [0, 64], sizes = [2, 32], strides = [1, 1]} : vector<2x96xf32> to vector<2x32xf32>
    %141 = vector.extract_strided_slice %123 {offsets = [0, 64], sizes = [2, 32], strides = [1, 1]} : vector<2x96xf32> to vector<2x32xf32>
    %142 = arith.mulf %131, %141 : vector<2x32xf32>
    %143 = arith.addf %140, %142 : vector<2x32xf32>
    %144 = math.tanh %143 : vector<2x32xf32>
    %cst_40 = arith.constant 1.000000e+00 : f32
    %145 = vector.broadcast %cst_40 : f32 to vector<2x32xf32>
    %146 = arith.subf %145, %139 : vector<2x32xf32>
    %147 = arith.mulf %146, %144 : vector<2x32xf32>
    %148 = arith.mulf %139, %114 : vector<2x32xf32>
    %149 = arith.addf %147, %148 : vector<2x32xf32>
    %150 = arith.index_cast %118 : i32 to index
    %c0_41 = arith.constant 0 : index
    %151 = vector.load %arg11[%150, %c0_41] : memref<16x32xf32, #tpu.memory_space<vmem>>, vector<2x32xf32>
    tpu.vector_store %arg11[%150, %c0_41], %149 {strides = array<i32>} : memref<16x32xf32, #tpu.memory_space<vmem>>, vector<2x32xf32>,
    %c4_i32 = arith.constant 4 : i32
    %c2_i32_42 = arith.constant 2 : i32
    %152 = arith.muli %c4_i32, %c2_i32_42 : i32
    %153 = tpu.assume_multiple %152, 2 : i32
    %154 = arith.index_cast %153 : i32 to index
    %c0_43 = arith.constant 0 : index
    %155 = vector.load %arg10[%154, %c0_43] : memref<16x96xf32, #tpu.memory_space<vmem>>, vector<2x96xf32>
    %cst_44 = arith.constant dense<0.000000e+00> : vector<2x96xf32>
    %156 = tpu.matmul %149, %9, %cst_44 {dimension_numbers = #tpu.dot_dimension_numbers<[1], [0], [0], [1], [0, 0, 1, 1], [], []>} : vector<2x32xf32>, vector<32x96xf32>, vector<2x96xf32> -> vector<2x96xf32>
    %157 = vector.broadcast %10 : vector<1x96xf32> to vector<2x96xf32>
    %158 = arith.addf %156, %157 : vector<2x96xf32>
    %159 = vector.extract_strided_slice %155 {offsets = [0, 0], sizes = [2, 32], strides = [1, 1]} : vector<2x96xf32> to vector<2x32xf32>
    %160 = vector.extract_strided_slice %158 {offsets = [0, 0], sizes = [2, 32], strides = [1, 1]} : vector<2x96xf32> to vector<2x32xf32>
    %161 = arith.addf %159, %160 : vector<2x32xf32>
    %162 = arith.negf %161 : vector<2x32xf32>
    %163 = math.exp %162 : vector<2x32xf32>
    %cst_45 = arith.constant 1.000000e+00 : f32
    %164 = vector.broadcast %cst_45 : f32 to vector<2x32xf32>
    %165 = arith.addf %164, %163 : vector<2x32xf32>
    %166 = arith.divf %164, %165 : vector<2x32xf32>
    %167 = vector.extract_strided_slice %155 {offsets = [0, 32], sizes = [2, 32], strides = [1, 1]} : vector<2x96xf32> to vector<2x32xf32>
    %168 = vector.extract_strided_slice %158 {offsets = [0, 32], sizes = [2, 32], strides = [1, 1]} : vector<2x96xf32> to vector<2x32xf32>
    %169 = arith.addf %167, %168 : vector<2x32xf32>
    %170 = arith.negf %169 : vector<2x32xf32>
    %171 = math.exp %170 : vector<2x32xf32>
    %cst_46 = arith.constant 1.000000e+00 : f32
    %172 = vector.broadcast %cst_46 : f32 to vector<2x32xf32>
    %173 = arith.addf %172, %171 : vector<2x32xf32>
    %174 = arith.divf %172, %173 : vector<2x32xf32>
    %175 = vector.extract_strided_slice %155 {offsets = [0, 64], sizes = [2, 32], strides = [1, 1]} : vector<2x96xf32> to vector<2x32xf32>
    %176 = vector.extract_strided_slice %158 {offsets = [0, 64], sizes = [2, 32], strides = [1, 1]} : vector<2x96xf32> to vector<2x32xf32>
    %177 = arith.mulf %166, %176 : vector<2x32xf32>
    %178 = arith.addf %175, %177 : vector<2x32xf32>
    %179 = math.tanh %178 : vector<2x32xf32>
    %cst_47 = arith.constant 1.000000e+00 : f32
    %180 = vector.broadcast %cst_47 : f32 to vector<2x32xf32>
    %181 = arith.subf %180, %174 : vector<2x32xf32>
    %182 = arith.mulf %181, %179 : vector<2x32xf32>
    %183 = arith.mulf %174, %149 : vector<2x32xf32>
    %184 = arith.addf %182, %183 : vector<2x32xf32>
    %185 = arith.index_cast %153 : i32 to index
    %c0_48 = arith.constant 0 : index
    %186 = vector.load %arg11[%185, %c0_48] : memref<16x32xf32, #tpu.memory_space<vmem>>, vector<2x32xf32>
    tpu.vector_store %arg11[%185, %c0_48], %184 {strides = array<i32>} : memref<16x32xf32, #tpu.memory_space<vmem>>, vector<2x32xf32>,
    %c5_i32 = arith.constant 5 : i32
    %c2_i32_49 = arith.constant 2 : i32
    %187 = arith.muli %c5_i32, %c2_i32_49 : i32
    %188 = tpu.assume_multiple %187, 2 : i32
    %189 = arith.index_cast %188 : i32 to index
    %c0_50 = arith.constant 0 : index
    %190 = vector.load %arg10[%189, %c0_50] : memref<16x96xf32, #tpu.memory_space<vmem>>, vector<2x96xf32>
    %cst_51 = arith.constant dense<0.000000e+00> : vector<2x96xf32>
    %191 = tpu.matmul %184, %9, %cst_51 {dimension_numbers = #tpu.dot_dimension_numbers<[1], [0], [0], [1], [0, 0, 1, 1], [], []>} : vector<2x32xf32>, vector<32x96xf32>, vector<2x96xf32> -> vector<2x96xf32>
    %192 = vector.broadcast %10 : vector<1x96xf32> to vector<2x96xf32>
    %193 = arith.addf %191, %192 : vector<2x96xf32>
    %194 = vector.extract_strided_slice %190 {offsets = [0, 0], sizes = [2, 32], strides = [1, 1]} : vector<2x96xf32> to vector<2x32xf32>
    %195 = vector.extract_strided_slice %193 {offsets = [0, 0], sizes = [2, 32], strides = [1, 1]} : vector<2x96xf32> to vector<2x32xf32>
    %196 = arith.addf %194, %195 : vector<2x32xf32>
    %197 = arith.negf %196 : vector<2x32xf32>
    %198 = math.exp %197 : vector<2x32xf32>
    %cst_52 = arith.constant 1.000000e+00 : f32
    %199 = vector.broadcast %cst_52 : f32 to vector<2x32xf32>
    %200 = arith.addf %199, %198 : vector<2x32xf32>
    %201 = arith.divf %199, %200 : vector<2x32xf32>
    %202 = vector.extract_strided_slice %190 {offsets = [0, 32], sizes = [2, 32], strides = [1, 1]} : vector<2x96xf32> to vector<2x32xf32>
    %203 = vector.extract_strided_slice %193 {offsets = [0, 32], sizes = [2, 32], strides = [1, 1]} : vector<2x96xf32> to vector<2x32xf32>
    %204 = arith.addf %202, %203 : vector<2x32xf32>
    %205 = arith.negf %204 : vector<2x32xf32>
    %206 = math.exp %205 : vector<2x32xf32>
    %cst_53 = arith.constant 1.000000e+00 : f32
    %207 = vector.broadcast %cst_53 : f32 to vector<2x32xf32>
    %208 = arith.addf %207, %206 : vector<2x32xf32>
    %209 = arith.divf %207, %208 : vector<2x32xf32>
    %210 = vector.extract_strided_slice %190 {offsets = [0, 64], sizes = [2, 32], strides = [1, 1]} : vector<2x96xf32> to vector<2x32xf32>
    %211 = vector.extract_strided_slice %193 {offsets = [0, 64], sizes = [2, 32], strides = [1, 1]} : vector<2x96xf32> to vector<2x32xf32>
    %212 = arith.mulf %201, %211 : vector<2x32xf32>
    %213 = arith.addf %210, %212 : vector<2x32xf32>
    %214 = math.tanh %213 : vector<2x32xf32>
    %cst_54 = arith.constant 1.000000e+00 : f32
    %215 = vector.broadcast %cst_54 : f32 to vector<2x32xf32>
    %216 = arith.subf %215, %209 : vector<2x32xf32>
    %217 = arith.mulf %216, %214 : vector<2x32xf32>
    %218 = arith.mulf %209, %184 : vector<2x32xf32>
    %219 = arith.addf %217, %218 : vector<2x32xf32>
    %220 = arith.index_cast %188 : i32 to index
    %c0_55 = arith.constant 0 : index
    %221 = vector.load %arg11[%220, %c0_55] : memref<16x32xf32, #tpu.memory_space<vmem>>, vector<2x32xf32>
    tpu.vector_store %arg11[%220, %c0_55], %219 {strides = array<i32>} : memref<16x32xf32, #tpu.memory_space<vmem>>, vector<2x32xf32>,
    %c6_i32 = arith.constant 6 : i32
    %c2_i32_56 = arith.constant 2 : i32
    %222 = arith.muli %c6_i32, %c2_i32_56 : i32
    %223 = tpu.assume_multiple %222, 2 : i32
    %224 = arith.index_cast %223 : i32 to index
    %c0_57 = arith.constant 0 : index
    %225 = vector.load %arg10[%224, %c0_57] : memref<16x96xf32, #tpu.memory_space<vmem>>, vector<2x96xf32>
    %cst_58 = arith.constant dense<0.000000e+00> : vector<2x96xf32>
    %226 = tpu.matmul %219, %9, %cst_58 {dimension_numbers = #tpu.dot_dimension_numbers<[1], [0], [0], [1], [0, 0, 1, 1], [], []>} : vector<2x32xf32>, vector<32x96xf32>, vector<2x96xf32> -> vector<2x96xf32>
    %227 = vector.broadcast %10 : vector<1x96xf32> to vector<2x96xf32>
    %228 = arith.addf %226, %227 : vector<2x96xf32>
    %229 = vector.extract_strided_slice %225 {offsets = [0, 0], sizes = [2, 32], strides = [1, 1]} : vector<2x96xf32> to vector<2x32xf32>
    %230 = vector.extract_strided_slice %228 {offsets = [0, 0], sizes = [2, 32], strides = [1, 1]} : vector<2x96xf32> to vector<2x32xf32>
    %231 = arith.addf %229, %230 : vector<2x32xf32>
    %232 = arith.negf %231 : vector<2x32xf32>
    %233 = math.exp %232 : vector<2x32xf32>
    %cst_59 = arith.constant 1.000000e+00 : f32
    %234 = vector.broadcast %cst_59 : f32 to vector<2x32xf32>
    %235 = arith.addf %234, %233 : vector<2x32xf32>
    %236 = arith.divf %234, %235 : vector<2x32xf32>
    %237 = vector.extract_strided_slice %225 {offsets = [0, 32], sizes = [2, 32], strides = [1, 1]} : vector<2x96xf32> to vector<2x32xf32>
    %238 = vector.extract_strided_slice %228 {offsets = [0, 32], sizes = [2, 32], strides = [1, 1]} : vector<2x96xf32> to vector<2x32xf32>
    %239 = arith.addf %237, %238 : vector<2x32xf32>
    %240 = arith.negf %239 : vector<2x32xf32>
    %241 = math.exp %240 : vector<2x32xf32>
    %cst_60 = arith.constant 1.000000e+00 : f32
    %242 = vector.broadcast %cst_60 : f32 to vector<2x32xf32>
    %243 = arith.addf %242, %241 : vector<2x32xf32>
    %244 = arith.divf %242, %243 : vector<2x32xf32>
    %245 = vector.extract_strided_slice %225 {offsets = [0, 64], sizes = [2, 32], strides = [1, 1]} : vector<2x96xf32> to vector<2x32xf32>
    %246 = vector.extract_strided_slice %228 {offsets = [0, 64], sizes = [2, 32], strides = [1, 1]} : vector<2x96xf32> to vector<2x32xf32>
    %247 = arith.mulf %236, %246 : vector<2x32xf32>
    %248 = arith.addf %245, %247 : vector<2x32xf32>
    %249 = math.tanh %248 : vector<2x32xf32>
    %cst_61 = arith.constant 1.000000e+00 : f32
    %250 = vector.broadcast %cst_61 : f32 to vector<2x32xf32>
    %251 = arith.subf %250, %244 : vector<2x32xf32>
    %252 = arith.mulf %251, %249 : vector<2x32xf32>
    %253 = arith.mulf %244, %219 : vector<2x32xf32>
    %254 = arith.addf %252, %253 : vector<2x32xf32>
    %255 = arith.index_cast %223 : i32 to index
    %c0_62 = arith.constant 0 : index
    %256 = vector.load %arg11[%255, %c0_62] : memref<16x32xf32, #tpu.memory_space<vmem>>, vector<2x32xf32>
    tpu.vector_store %arg11[%255, %c0_62], %254 {strides = array<i32>} : memref<16x32xf32, #tpu.memory_space<vmem>>, vector<2x32xf32>,
    %c7_i32 = arith.constant 7 : i32
    %c2_i32_63 = arith.constant 2 : i32
    %257 = arith.muli %c7_i32, %c2_i32_63 : i32
    %258 = tpu.assume_multiple %257, 2 : i32
    %259 = arith.index_cast %258 : i32 to index
    %c0_64 = arith.constant 0 : index
    %260 = vector.load %arg10[%259, %c0_64] : memref<16x96xf32, #tpu.memory_space<vmem>>, vector<2x96xf32>
    %cst_65 = arith.constant dense<0.000000e+00> : vector<2x96xf32>
    %261 = tpu.matmul %254, %9, %cst_65 {dimension_numbers = #tpu.dot_dimension_numbers<[1], [0], [0], [1], [0, 0, 1, 1], [], []>} : vector<2x32xf32>, vector<32x96xf32>, vector<2x96xf32> -> vector<2x96xf32>
    %262 = vector.broadcast %10 : vector<1x96xf32> to vector<2x96xf32>
    %263 = arith.addf %261, %262 : vector<2x96xf32>
    %264 = vector.extract_strided_slice %260 {offsets = [0, 0], sizes = [2, 32], strides = [1, 1]} : vector<2x96xf32> to vector<2x32xf32>
    %265 = vector.extract_strided_slice %263 {offsets = [0, 0], sizes = [2, 32], strides = [1, 1]} : vector<2x96xf32> to vector<2x32xf32>
    %266 = arith.addf %264, %265 : vector<2x32xf32>
    %267 = arith.negf %266 : vector<2x32xf32>
    %268 = math.exp %267 : vector<2x32xf32>
    %cst_66 = arith.constant 1.000000e+00 : f32
    %269 = vector.broadcast %cst_66 : f32 to vector<2x32xf32>
    %270 = arith.addf %269, %268 : vector<2x32xf32>
    %271 = arith.divf %269, %270 : vector<2x32xf32>
    %272 = vector.extract_strided_slice %260 {offsets = [0, 32], sizes = [2, 32], strides = [1, 1]} : vector<2x96xf32> to vector<2x32xf32>
    %273 = vector.extract_strided_slice %263 {offsets = [0, 32], sizes = [2, 32], strides = [1, 1]} : vector<2x96xf32> to vector<2x32xf32>
    %274 = arith.addf %272, %273 : vector<2x32xf32>
    %275 = arith.negf %274 : vector<2x32xf32>
    %276 = math.exp %275 : vector<2x32xf32>
    %cst_67 = arith.constant 1.000000e+00 : f32
    %277 = vector.broadcast %cst_67 : f32 to vector<2x32xf32>
    %278 = arith.addf %277, %276 : vector<2x32xf32>
    %279 = arith.divf %277, %278 : vector<2x32xf32>
    %280 = vector.extract_strided_slice %260 {offsets = [0, 64], sizes = [2, 32], strides = [1, 1]} : vector<2x96xf32> to vector<2x32xf32>
    %281 = vector.extract_strided_slice %263 {offsets = [0, 64], sizes = [2, 32], strides = [1, 1]} : vector<2x96xf32> to vector<2x32xf32>
    %282 = arith.mulf %271, %281 : vector<2x32xf32>
    %283 = arith.addf %280, %282 : vector<2x32xf32>
    %284 = math.tanh %283 : vector<2x32xf32>
    %cst_68 = arith.constant 1.000000e+00 : f32
    %285 = vector.broadcast %cst_68 : f32 to vector<2x32xf32>
    %286 = arith.subf %285, %279 : vector<2x32xf32>
    %287 = arith.mulf %286, %284 : vector<2x32xf32>
    %288 = arith.mulf %279, %254 : vector<2x32xf32>
    %289 = arith.addf %287, %288 : vector<2x32xf32>
    %290 = arith.index_cast %258 : i32 to index
    %c0_69 = arith.constant 0 : index
    %291 = vector.load %arg11[%290, %c0_69] : memref<16x32xf32, #tpu.memory_space<vmem>>, vector<2x32xf32>
    tpu.vector_store %arg11[%290, %c0_69], %289 {strides = array<i32>} : memref<16x32xf32, #tpu.memory_space<vmem>>, vector<2x32xf32>,
    %c8_i32 = arith.constant 8 : i32
    %c0_70 = arith.constant 0 : index
    %c0_71 = arith.constant 0 : index
    %292 = vector.load %arg9[%c0_70, %c0_71] : memref<2x32xf32, #tpu.memory_space<vmem>>, vector<2x32xf32>
    tpu.vector_store %arg9[%c0_70, %c0_71], %289 {strides = array<i32>} : memref<2x32xf32, #tpu.memory_space<vmem>>, vector<2x32xf32>,
    %c0_72 = arith.constant 0 : index
    %c0_73 = arith.constant 0 : index
    %293 = vector.load %arg11[%c0_72, %c0_73] : memref<16x32xf32, #tpu.memory_space<vmem>>, vector<16x32xf32>
    %c0_74 = arith.constant 0 : index
    %c0_75 = arith.constant 0 : index
    %294 = vector.load %arg6[%c0_74, %c0_75] : memref<32x128xf32, #tpu.memory_space<vmem>>, vector<32x128xf32>
    %cst_76 = arith.constant dense<0.000000e+00> : vector<16x128xf32>
    %295 = tpu.matmul %293, %294, %cst_76 {dimension_numbers = #tpu.dot_dimension_numbers<[1], [0], [0], [1], [0, 0, 1, 1], [], []>} : vector<16x32xf32>, vector<32x128xf32>, vector<16x128xf32> -> vector<16x128xf32>
    %c0_77 = arith.constant 0 : index
    %c0_78 = arith.constant 0 : index
    %296 = vector.load %arg7[%c0_77, %c0_78] : memref<1x128xf32, #tpu.memory_space<vmem>>, vector<1x128xf32>
    %297 = vector.broadcast %296 : vector<1x128xf32> to vector<16x128xf32>
    %298 = arith.addf %295, %297 : vector<16x128xf32>
    %cst_79 = arith.constant dense<0xFF800000> : vector<16xf32>
    %299 = vector.multi_reduction <maximumf>, %298, %cst_79 [1] : vector<16x128xf32> to vector<16xf32>
    %300 = vector.shape_cast %299 : vector<16xf32> to vector<16x1xf32>
    %301 = vector.broadcast %300 : vector<16x1xf32> to vector<16x128xf32>
    %302 = arith.subf %298, %301 : vector<16x128xf32>
    %303 = math.exp %302 : vector<16x128xf32>
    %cst_80 = arith.constant dense<0.000000e+00> : vector<16xf32>
    %304 = vector.multi_reduction <add>, %303, %cst_80 [1] : vector<16x128xf32> to vector<16xf32>
    %305 = vector.shape_cast %304 : vector<16xf32> to vector<16x1xf32>
    %306 = math.log %305 : vector<16x1xf32>
    %307 = arith.addf %306, %300 : vector<16x1xf32>
    %308 = vector.broadcast %307 : vector<16x1xf32> to vector<16x128xf32>
    %309 = arith.subf %298, %308 : vector<16x128xf32>
    %c0_81 = arith.constant 0 : index
    %c0_82 = arith.constant 0 : index
    %310 = vector.load %arg8[%c0_81, %c0_82] : memref<16x128xf32, #tpu.memory_space<vmem>>, vector<16x128xf32>
    tpu.vector_store %arg8[%c0_81, %c0_82], %309 {strides = array<i32>} : memref<16x128xf32, #tpu.memory_space<vmem>>, vector<16x128xf32>,
    return
  }
}

</mosaic_0001>

<llo_original>
// kernel: tpu_custom_call.1
$region0: #{tpu_custom_call.1}
  #allocation0 [shape = 'u32[]', space=smem, size = 0x4, offset = 0x4, fixed_abs, tag = 'smem constant byte address 0x4 - core index']
  #allocation1 [shape = 'u32[144,128]{1,0:T(1,128)}', space=vmem, size = 0x12000, scoped, tag = 'internal scratch']
  #allocation2 [shape = 'f32[16,96]{1,0:T(8,128)}', space=vmem, size = 0x2000, scoped, tag = 'scratch operand']
  #allocation3 [shape = 'f32[16,32]{1,0:T(8,128)}', space=vmem, size = 0x2000, scoped, tag = 'scratch operand']
  %s0 = inlined_call_operand.hbm [shape: f32[16,32], index: 0, kind: input, shape index: {}]
  %s1 = inlined_call_operand.vmem [shape: f32[2,32], index: 1, kind: input, shape index: {}]
  %s2 = inlined_call_operand.hbm [shape: f32[32,96], index: 2, kind: input, shape index: {}]
  %s3 = inlined_call_operand.hbm [shape: f32[32,96], index: 3, kind: input, shape index: {}]
  %s4 = inlined_call_operand.vmem [shape: f32[1,96], index: 4, kind: input, shape index: {}]
  %s5 = inlined_call_operand.vmem [shape: f32[1,96], index: 5, kind: input, shape index: {}]
  %s6 = inlined_call_operand.hbm [shape: f32[32,128], index: 6, kind: input, shape index: {}]
  %s7 = inlined_call_operand.vmem [shape: f32[1,128], index: 7, kind: input, shape index: {}]
  %s8 = inlined_call_operand.hbm [shape: f32[16,128], index: 8, kind: output, shape index: {0}]
  %s9 = inlined_call_operand.hbm [shape: f32[2,32], index: 9, kind: output, shape index: {1}]
  %10 = xla_tuple %s8, %s9
  %s11 = sld [smem:[#allocation0]]
  $region66: #{tpu_custom_call.1} parent=0
    _
  %s13 = ssub.s32 1, %s11
  %s14 = scalar_select 0, %s13, %s11
  $region1: #{tpu_custom_call.1} parent=0
    #allocation4 [shape = 'u8[8192]{0}', space=vmem, size = 0x2000, scoped, tag = 'input window, operand 0, single buffered']
    #allocation5 [shape = 's32[1]{0}', space=sflag, size = 0x4, scoped, tag = 'scoped memory for tpu_custom_call.1']
    #allocation6 [shape = 's32[1]{0}', space=sflag, size = 0x4, scoped, tag = 'scoped memory for tpu_custom_call.1']
    #allocation7 [shape = 'u8[16384]{0}', space=vmem, size = 0x4000, scoped, tag = 'input window, operand 2, single buffered']
    #allocation8 [shape = 's32[1]{0}', space=sflag, size = 0x4, scoped, tag = 'scoped memory for tpu_custom_call.1']
    #allocation9 [shape = 'u8[16384]{0}', space=vmem, size = 0x4000, scoped, tag = 'input window, operand 3, single buffered']
    #allocation10 [shape = 'u8[16384]{0}', space=vmem, size = 0x4000, scoped, tag = 'input window, operand 6, single buffered']
    #allocation11 [shape = 's32[1]{0}', space=sflag, size = 0x4, scoped, tag = 'scoped memory for tpu_custom_call.1']
    #allocation12 [shape = 'u8[8192]{0}', space=vmem, size = 0x2000, scoped, tag = 'output window, operand 0, single buffered']
    #allocation13 [shape = 'u8[1024]{0}', space=vmem, size = 0x400, scoped, tag = 'output window, operand 1, single buffered']
    #allocation14 [shape = 's32[1]{0}', space=sflag, size = 0x4, scoped, tag = 'scoped memory for tpu_custom_call.1']
    %15 = vsyncpa [#allocation5], 0
    %16 = vsyncpa [#allocation8], 0
    %17 = vsyncpa [#allocation11], 0
    %18 = vsyncpa [#allocation6], 0
    %19 = vsyncpa [#allocation14], 0
    // Predicated region
    $region2: #{tpu_custom_call.1} parent=1 // pred_check
      _
    $region3: #{tpu_custom_call.1} parent=1 // pred_check_branch
      %21 = sbr.rel (0) target = $region5
    $region4: #{tpu_custom_call.1} parent=1 // pred_region
      %s23 = ssub.s32 256, 256
      %24 = vsyncadd [#allocation5], %s23
      %s25 = sshll.u32 [#allocation4], 4
      %s26 = int_to_ptr.vmem [resolvable:$true] %s25
      %31 = dma.hbm_to_vmem [thread:$0]  %s0, 256, %s26, [#allocation5], 128, 128, 8
    $region5: #{tpu_custom_call.1} parent=1 // pred_fallthru
      _
    // Predicated region
    $region6: #{tpu_custom_call.1} parent=1 // pred_check
      _
    $region7: #{tpu_custom_call.1} parent=1 // pred_check_branch
      %33 = sbr.rel (0) target = $region9
    $region8: #{tpu_custom_call.1} parent=1 // pred_region
      _
    $region9: #{tpu_custom_call.1} parent=1 // pred_fallthru
      _
    // Predicated region
    $region10: #{tpu_custom_call.1} parent=1 // pred_check
      _
    $region11: #{tpu_custom_call.1} parent=1 // pred_check_branch
      %35 = sbr.rel (0) target = $region13
    $region12: #{tpu_custom_call.1} parent=1 // pred_region
      %s37 = ssub.s32 512, 512
      %38 = vsyncadd [#allocation8], %s37
      %s39 = sshll.u32 [#allocation7], 4
      %s40 = int_to_ptr.vmem [resolvable:$true] %s39
      %45 = dma.hbm_to_vmem [thread:$0]  %s2, 512, %s40, [#allocation8], 128, 128, 8
    $region13: #{tpu_custom_call.1} parent=1 // pred_fallthru
      _
    // Predicated region
    $region14: #{tpu_custom_call.1} parent=1 // pred_check
      _
    $region15: #{tpu_custom_call.1} parent=1 // pred_check_branch
      %47 = sbr.rel (0) target = $region17
    $region16: #{tpu_custom_call.1} parent=1 // pred_region
      %s49 = ssub.s32 512, 512
      %50 = vsyncadd [#allocation8], %s49
      %s51 = sshll.u32 [#allocation9], 4
      %s52 = int_to_ptr.vmem [resolvable:$true] %s51
      %57 = dma.hbm_to_vmem [thread:$0]  %s3, 512, %s52, [#allocation8], 128, 128, 8
    $region17: #{tpu_custom_call.1} parent=1 // pred_fallthru
      _
    // Predicated region
    $region18: #{tpu_custom_call.1} parent=1 // pred_check
      _
    $region19: #{tpu_custom_call.1} parent=1 // pred_check_branch
      %59 = sbr.rel (0) target = $region21
    $region20: #{tpu_custom_call.1} parent=1 // pred_region
      _
    $region21: #{tpu_custom_call.1} parent=1 // pred_fallthru
      _
    // Predicated region
    $region22: #{tpu_custom_call.1} parent=1 // pred_check
      _
    $region23: #{tpu_custom_call.1} parent=1 // pred_check_branch
      %61 = sbr.rel (0) target = $region25
    $region24: #{tpu_custom_call.1} parent=1 // pred_region
      _
    $region25: #{tpu_custom_call.1} parent=1 // pred_fallthru
      _
    // Predicated region
    $region26: #{tpu_custom_call.1} parent=1 // pred_check
      _
    $region27: #{tpu_custom_call.1} parent=1 // pred_check_branch
      %63 = sbr.rel (0) target = $region29
    $region28: #{tpu_custom_call.1} parent=1 // pred_region
      %s65 = ssub.s32 512, 512
      %66 = vsyncadd [#allocation11], %s65
      %s67 = sshll.u32 [#allocation10], 4
      %s68 = int_to_ptr.vmem [resolvable:$true] %s67
      %73 = dma.hbm_to_vmem [thread:$0]  %s6, 512, %s68, [#allocation11], 128, 128, 8
    $region29: #{tpu_custom_call.1} parent=1 // pred_fallthru
      _
    // Predicated region
    $region30: #{tpu_custom_call.1} parent=1 // pred_check
      _
    $region31: #{tpu_custom_call.1} parent=1 // pred_check_branch
      %75 = sbr.rel (0) target = $region33
    $region32: #{tpu_custom_call.1} parent=1 // pred_region
      _
    $region33: #{tpu_custom_call.1} parent=1 // pred_fallthru
      _
    // Predicated region
    $region34: #{tpu_custom_call.1} parent=1 // pred_check
      _
    $region35: #{tpu_custom_call.1} parent=1 // pred_check_branch
      %77 = sbr.rel (0) target = $region37
    $region36: #{tpu_custom_call.1} parent=1 // pred_region
      %78 = dma.done [#allocation5], 256
    $region37: #{tpu_custom_call.1} parent=1 // pred_fallthru
      _
    // Predicated region
    $region38: #{tpu_custom_call.1} parent=1 // pred_check
      _
    $region39: #{tpu_custom_call.1} parent=1 // pred_check_branch
      %80 = sbr.rel (0) target = $region41
    $region40: #{tpu_custom_call.1} parent=1 // pred_region
      %81 = dma.done [#allocation8], 512
    $region41: #{tpu_custom_call.1} parent=1 // pred_fallthru
      _
    // Predicated region
    $region42: #{tpu_custom_call.1} parent=1 // pred_check
      _
    $region43: #{tpu_custom_call.1} parent=1 // pred_check_branch
      %83 = sbr.rel (0) target = $region45
    $region44: #{tpu_custom_call.1} parent=1 // pred_region
      %84 = dma.done [#allocation8], 512
    $region45: #{tpu_custom_call.1} parent=1 // pred_fallthru
      _
    // Predicated region
    $region46: #{tpu_custom_call.1} parent=1 // pred_check
      _
    $region47: #{tpu_custom_call.1} parent=1 // pred_check_branch
      %86 = sbr.rel (0) target = $region49
    $region48: #{tpu_custom_call.1} parent=1 // pred_region
      %87 = dma.done [#allocation11], 512
    $region49: #{tpu_custom_call.1} parent=1 // pred_fallthru
      _
    %v88 = vld [vmem:[#allocation4] sm:$0xff]
    %v89 = vld [vmem:[#allocation4 + $0x8] sm:$0xff]
    %v90 = vmax.f32 %v88, 0.0
    %v91 = vmax.f32 %v89, 0.0
    %v92 = vld [vmem:[#allocation7] sm:$0xff]
    %v93 = vld [vmem:[#allocation7 + $0x8] sm:$0xff]
    %v94 = vld [vmem:[#allocation7 + $0x10] sm:$0xff]
    %v95 = vld [vmem:[#allocation7 + $0x18] sm:$0xff]
    %v96 = vld [vmem:[%s4] sm:$0x1]
    %v98 = vlaneseq
    %v99 = vshrl.u32 %v98, 7
    %v100 = vsub.s32 0, %v99
    %v101 = vrot.slane %v96, %v100
    %vm103 = vcmask 261120
    %v105 = vsel %vm103, %v90, 0
    %v108 = vsel %vm103, %v91, 0
    %110 = vmatprep.subr.mxu0 0.0
    %111 = vmatpush1.msra.mxu0 %v92
    %112 = vmatprep.subr.mxu0 0.0
    %113 = vmatpush1.msra.mxu0 %v93
    %114 = vmatprep.subr.mxu0 0.0
    %115 = vmatpush1.msra.mxu0 %v94
    %116 = vmatprep.subr.mxu0 0.0
    %117 = vmatpush1.msra.mxu0 %v95
    %118 = vmatprep.subr.mxu0 0.0
    %119 = vmatpush1.msra.mxu0 0.0
    %120 = vmatprep.subr.mxu0 0.0
    %121 = vmatpush1.msra.mxu0 0.0
    %122 = vmatprep.subr.mxu0 0.0
    %123 = vmatpush1.msra.mxu0 0.0
    %124 = vmatprep.subr.mxu0 0.0
    %125 = vmatpush1.msra.mxu0 0.0
    %126 = vmatprep.subr.mxu0 0.0
    %127 = vmatpush1.msra.mxu0 0.0
    %128 = vmatprep.subr.mxu0 0.0
    %129 = vmatpush1.msra.mxu0 0.0
    %130 = vmatprep.subr.mxu0 0.0
    %131 = vmatpush1.msra.mxu0 0.0
    %132 = vmatprep.subr.mxu0 0.0
    %133 = vmatpush1.msra.mxu0 0.0
    %134 = vmatprep.subr.mxu0 0.0
    %135 = vmatpush1.msra.mxu0 0.0
    %136 = vmatprep.subr.mxu0 0.0
    %137 = vmatpush1.msra.mxu0 0.0
    %138 = vmatprep.subr.mxu0 0.0
    %139 = vmatpush1.msra.mxu0 0.0
    %140 = vmatprep.subr.mxu0 0.0
    %141 = vmatpush1.msra.mxu0 0.0
    %142 = vmatprep.subr.mxu0 0.0
    %143 = vmatpush1.msra.mxu0 0.0
    %144 = vmatprep.subr.mxu0 0.0
    %145 = vmatpush1.msra.mxu0 0.0
    %146 = vmatprep.subr.mxu0 0.0
    %147 = vmatpush1.msra.mxu0 0.0
    %148 = vmatprep.subr.mxu0 0.0
    %149 = vmatpush1.msra.mxu0 0.0
    %150 = vmatprep.subr.mxu0 0.0
    %151 = vmatpush1.msra.mxu0 0.0
    %152 = vmatprep.subr.mxu0 0.0
    %153 = vmatpush1.msra.mxu0 0.0
    %154 = vmatprep.subr.mxu0 0.0
    %155 = vmatpush1.msra.mxu0 0.0
    %156 = vmatprep.subr.mxu0 0.0
    %157 = vmatpush1.msra.mxu0 0.0
    %158 = vmatprep.subr.mxu0 0.0
    %159 = vmatpush1.msra.mxu0 0.0
    %160 = vmatprep.subr.mxu0 0.0
    %161 = vmatpush1.msra.mxu0 0.0
    %162 = vmatprep.subr.mxu0 0.0
    %163 = vmatpush1.msra.mxu0 0.0
    %164 = vmatprep.subr.mxu0 0.0
    %165 = vmatpush1.msra.mxu0 0.0
    %166 = vmatprep.subr.mxu0 0.0
    %167 = vmatpush1.msra.mxu0 0.0
    %168 = vmatprep.subr.mxu0 0.0
    %169 = vmatpush1.msra.mxu0 0.0
    %170 = vmatprep.subr.mxu0 0.0
    %171 = vmatpush1.msra.mxu0 0.0
    %172 = vmatprep.subr.mxu0 0.0
    %173 = vmatpush1.msra.mxu0 0.0
    %174 = vmatprep.mubr.f32.mxu0 0.0
    %175 = vmatmul.mubr.f32.gmra.mrb[0].mxu0 %v105
    %v176 = vpop.f32.mrb[0].mxu0
    %v177 = vadd.f32 %v101, %v176
    %v178 = vpop.f32.mrb[0].mxu0
    %179 = vmatprep.mubr.f32.mxu0 0.0
    %180 = vmatmul.mubr.f32.gmra.mrb[0].mxu0 %v108
    %v181 = vpop.f32.mrb[0].mxu0
    %v182 = vadd.f32 %v101, %v181
    %v183 = vpop.f32.mrb[0].mxu0
    %184 = vdwg.mxu0
    %vm185 = vcmask 785408
    %186 = vst.msk [vmem:[#allocation2] sm:$0xff] %vm185, %v177
    %187 = vst.msk [vmem:[#allocation2 + $0x8] sm:$0xff] %vm185, %v182
    %v188 = vld [vmem:[#allocation9] sm:$0xff]
    %v189 = vld [vmem:[#allocation9 + $0x8] sm:$0xff]
    %v190 = vld [vmem:[#allocation9 + $0x10] sm:$0xff]
    %v191 = vld [vmem:[#allocation9 + $0x18] sm:$0xff]
    %v192 = vld [vmem:[%s5] sm:$0x1]
    %v193 = vld [vmem:[%s1] sm:$0x3]
    %v194 = vld [vmem:[#allocation2] sm:$0x3]
    %v196 = vlaneseq
    %v197 = vshrl.u32 %v196, 7
    %v198 = vsub.s32 0, %v197
    %v199 = vrot.slane %v192, %v198
    %v202 = vsel %vm103, %v193, 0
    %204 = vmatprep.subr.mxu0 0.0
    %205 = vmatpush1.msra.mxu0 %v188
    %206 = vmatprep.subr.mxu0 0.0
    %207 = vmatpush1.msra.mxu0 %v189
    %208 = vmatprep.subr.mxu0 0.0
    %209 = vmatpush1.msra.mxu0 %v190
    %210 = vmatprep.subr.mxu0 0.0
    %211 = vmatpush1.msra.mxu0 %v191
    %212 = vmatprep.subr.mxu0 0.0
    %213 = vmatpush1.msra.mxu0 0.0
    %214 = vmatprep.subr.mxu0 0.0
    %215 = vmatpush1.msra.mxu0 0.0
    %216 = vmatprep.subr.mxu0 0.0
    %217 = vmatpush1.msra.mxu0 0.0
    %218 = vmatprep.subr.mxu0 0.0
    %219 = vmatpush1.msra.mxu0 0.0
    %220 = vmatprep.subr.mxu0 0.0
    %221 = vmatpush1.msra.mxu0 0.0
    %222 = vmatprep.subr.mxu0 0.0
    %223 = vmatpush1.msra.mxu0 0.0
    %224 = vmatprep.subr.mxu0 0.0
    %225 = vmatpush1.msra.mxu0 0.0
    %226 = vmatprep.subr.mxu0 0.0
    %227 = vmatpush1.msra.mxu0 0.0
    %228 = vmatprep.subr.mxu0 0.0
    %229 = vmatpush1.msra.mxu0 0.0
    %230 = vmatprep.subr.mxu0 0.0
    %231 = vmatpush1.msra.mxu0 0.0
    %232 = vmatprep.subr.mxu0 0.0
    %233 = vmatpush1.msra.mxu0 0.0
    %234 = vmatprep.subr.mxu0 0.0
    %235 = vmatpush1.msra.mxu0 0.0
    %236 = vmatprep.subr.mxu0 0.0
    %237 = vmatpush1.msra.mxu0 0.0
    %238 = vmatprep.subr.mxu0 0.0
    %239 = vmatpush1.msra.mxu0 0.0
    %240 = vmatprep.subr.mxu0 0.0
    %241 = vmatpush1.msra.mxu0 0.0
    %242 = vmatprep.subr.mxu0 0.0
    %243 = vmatpush1.msra.mxu0 0.0
    %244 = vmatprep.subr.mxu0 0.0
    %245 = vmatpush1.msra.mxu0 0.0
    %246 = vmatprep.subr.mxu0 0.0
    %247 = vmatpush1.msra.mxu0 0.0
    %248 = vmatprep.subr.mxu0 0.0
    %249 = vmatpush1.msra.mxu0 0.0
    %250 = vmatprep.subr.mxu0 0.0
    %251 = vmatpush1.msra.mxu0 0.0
    %252 = vmatprep.subr.mxu0 0.0
    %253 = vmatpush1.msra.mxu0 0.0
    %254 = vmatprep.subr.mxu0 0.0
    %255 = vmatpush1.msra.mxu0 0.0
    %256 = vmatprep.subr.mxu0 0.0
    %257 = vmatpush1.msra.mxu0 0.0
    %258 = vmatprep.subr.mxu0 0.0
    %259 = vmatpush1.msra.mxu0 0.0
    %260 = vmatprep.subr.mxu0 0.0
    %261 = vmatpush1.msra.mxu0 0.0
    %262 = vmatprep.subr.mxu0 0.0
    %263 = vmatpush1.msra.mxu0 0.0
    %264 = vmatprep.subr.mxu0 0.0
    %265 = vmatpush1.msra.mxu0 0.0
    %266 = vmatprep.subr.mxu0 0.0
    %267 = vmatpush1.msra.mxu0 0.0
    %268 = vmatprep.mubr.f32.mxu0 0.0
    %269 = vmatmul.mubr.f32.gmra.mrb[0].mxu0 %v202
    %v270 = vpop.f32.mrb[0].mxu0
    %v271 = vadd.f32 %v199, %v270
    %v272 = vpop.f32.mrb[0].mxu0
    %273 = vdwg.mxu0
    %v274 = vadd.f32 %v194, %v271
    %v275 = vxor.u32 %v274, 2147483648
    %v276 = vmul.f32 %v275, 1.442695
    %v277 = vpow.pop %v276
    %v278 = vadd.f32 %v277, 1.0
    %v279 = vrcp.pop %v278
    %v280 = vmul.f32 1.0, %v279
    %282 = vrot.lane.b32.xlu0 %v271, 64
    %v283 = vpop.permute.xlu0 %282
    %v285 = vmul.f32 %v280, %v283
    %287 = vrot.lane.b32.xlu0 %v285, 64
    %v288 = vpop.permute.xlu0 %287
    %v290 = vadd.f32 %v194, %v288
    %v291 = vtanh.pop %v290
    %v292 = vsub.f32 1.0, %v280
    %294 = vrot.lane.b32.xlu0 %v291, 96
    %v295 = vpop.permute.xlu0 %294
    %v297 = vmul.f32 %v292, %v295
    %298 = vrot.lane.b32.xlu0 %v193, 32
    %v299 = vpop.permute.xlu0 %298
    %v301 = vmul.f32 %v280, %v299
    %v302 = vadd.f32 %v297, %v301
    %304 = vrot.lane.b32.xlu0 %v302, 96
    %v305 = vpop.permute.xlu0 %304
    %vm307 = vcmask 254976
    %308 = vst.msk [vmem:[#allocation3] sm:$0x3] %vm307, %v305
    %s309 = scalar_lea.vmem [#allocation2], 2
    %v310 = vld [vmem:[%s309] sm:$0x3]
    %v311 = vsel %vm103, %v305, 0
    %313 = vmatprep.subr.mxu0 0.0
    %314 = vmatpush1.msra.mxu0 %v188
    %315 = vmatprep.subr.mxu0 0.0
    %316 = vmatpush1.msra.mxu0 %v189
    %317 = vmatprep.subr.mxu0 0.0
    %318 = vmatpush1.msra.mxu0 %v190
    %319 = vmatprep.subr.mxu0 0.0
    %320 = vmatpush1.msra.mxu0 %v191
    %321 = vmatprep.subr.mxu0 0.0
    %322 = vmatpush1.msra.mxu0 0.0
    %323 = vmatprep.subr.mxu0 0.0
    %324 = vmatpush1.msra.mxu0 0.0
    %325 = vmatprep.subr.mxu0 0.0
    %326 = vmatpush1.msra.mxu0 0.0
    %327 = vmatprep.subr.mxu0 0.0
    %328 = vmatpush1.msra.mxu0 0.0
    %329 = vmatprep.subr.mxu0 0.0
    %330 = vmatpush1.msra.mxu0 0.0
    %331 = vmatprep.subr.mxu0 0.0
    %332 = vmatpush1.msra.mxu0 0.0
    %333 = vmatprep.subr.mxu0 0.0
    %334 = vmatpush1.msra.mxu0 0.0
    %335 = vmatprep.subr.mxu0 0.0
    %336 = vmatpush1.msra.mxu0 0.0
    %337 = vmatprep.subr.mxu0 0.0
    %338 = vmatpush1.msra.mxu0 0.0
    %339 = vmatprep.subr.mxu0 0.0
    %340 = vmatpush1.msra.mxu0 0.0
    %341 = vmatprep.subr.mxu0 0.0
    %342 = vmatpush1.msra.mxu0 0.0
    %343 = vmatprep.subr.mxu0 0.0
    %344 = vmatpush1.msra.mxu0 0.0
    %345 = vmatprep.subr.mxu0 0.0
    %346 = vmatpush1.msra.mxu0 0.0
    %347 = vmatprep.subr.mxu0 0.0
    %348 = vmatpush1.msra.mxu0 0.0
    %349 = vmatprep.subr.mxu0 0.0
    %350 = vmatpush1.msra.mxu0 0.0
    %351 = vmatprep.subr.mxu0 0.0
    %352 = vmatpush1.msra.mxu0 0.0
    %353 = vmatprep.subr.mxu0 0.0
    %354 = vmatpush1.msra.mxu0 0.0
    %355 = vmatprep.subr.mxu0 0.0
    %356 = vmatpush1.msra.mxu0 0.0
    %357 = vmatprep.subr.mxu0 0.0
    %358 = vmatpush1.msra.mxu0 0.0
    %359 = vmatprep.subr.mxu0 0.0
    %360 = vmatpush1.msra.mxu0 0.0
    %361 = vmatprep.subr.mxu0 0.0
    %362 = vmatpush1.msra.mxu0 0.0
    %363 = vmatprep.subr.mxu0 0.0
    %364 = vmatpush1.msra.mxu0 0.0
    %365 = vmatprep.subr.mxu0 0.0
    %366 = vmatpush1.msra.mxu0 0.0
    %367 = vmatprep.subr.mxu0 0.0
    %368 = vmatpush1.msra.mxu0 0.0
    %369 = vmatprep.subr.mxu0 0.0
    %370 = vmatpush1.msra.mxu0 0.0
    %371 = vmatprep.subr.mxu0 0.0
    %372 = vmatpush1.msra.mxu0 0.0
    %373 = vmatprep.subr.mxu0 0.0
    %374 = vmatpush1.msra.mxu0 0.0
    %375 = vmatprep.subr.mxu0 0.0
    %376 = vmatpush1.msra.mxu0 0.0
    %377 = vmatprep.mubr.f32.mxu0 0.0
    %378 = vmatmul.mubr.f32.gmra.mrb[0].mxu0 %v311
    %v379 = vpop.f32.mrb[0].mxu0
    %v380 = vadd.f32 %v199, %v379
    %v381 = vpop.f32.mrb[0].mxu0
    %382 = vdwg.mxu0
    %v383 = vadd.f32 %v310, %v380
    %v384 = vxor.u32 %v383, 2147483648
    %v385 = vmul.f32 %v384, 1.442695
    %v386 = vpow.pop %v385
    %v387 = vadd.f32 %v386, 1.0
    %v388 = vrcp.pop %v387
    %v389 = vmul.f32 1.0, %v388
    %391 = vrot.lane.b32.xlu0 %v380, 64
    %v392 = vpop.permute.xlu0 %391
    %v394 = vmul.f32 %v389, %v392
    %396 = vrot.lane.b32.xlu0 %v394, 64
    %v397 = vpop.permute.xlu0 %396
    %v399 = vadd.f32 %v310, %v397
    %v400 = vtanh.pop %v399
    %v401 = vsub.f32 1.0, %v389
    %403 = vrot.lane.b32.xlu0 %v400, 96
    %v404 = vpop.permute.xlu0 %403
    %v406 = vmul.f32 %v401, %v404
    %v407 = vmul.f32 %v389, %v302
    %v408 = vadd.f32 %v406, %v407
    %410 = vrot.lane.b32.xlu0 %v408, 96
    %v411 = vpop.permute.xlu0 %410
    %s413 = scalar_lea.vmem [#allocation3], 2
    %414 = vst.msk [vmem:[%s413] sm:$0x3] %vm307, %v411
    %s415 = scalar_lea.vmem [#allocation2], 4
    %v416 = vld [vmem:[%s415] sm:$0x3]
    %v417 = vsel %vm103, %v411, 0
    %419 = vmatprep.subr.mxu0 0.0
    %420 = vmatpush1.msra.mxu0 %v188
    %421 = vmatprep.subr.mxu0 0.0
    %422 = vmatpush1.msra.mxu0 %v189
    %423 = vmatprep.subr.mxu0 0.0
    %424 = vmatpush1.msra.mxu0 %v190
    %425 = vmatprep.subr.mxu0 0.0
    %426 = vmatpush1.msra.mxu0 %v191
    %427 = vmatprep.subr.mxu0 0.0
    %428 = vmatpush1.msra.mxu0 0.0
    %429 = vmatprep.subr.mxu0 0.0
    %430 = vmatpush1.msra.mxu0 0.0
    %431 = vmatprep.subr.mxu0 0.0
    %432 = vmatpush1.msra.mxu0 0.0
    %433 = vmatprep.subr.mxu0 0.0
    %434 = vmatpush1.msra.mxu0 0.0
    %435 = vmatprep.subr.mxu0 0.0
    %436 = vmatpush1.msra.mxu0 0.0
    %437 = vmatprep.subr.mxu0 0.0
    %438 = vmatpush1.msra.mxu0 0.0
    %439 = vmatprep.subr.mxu0 0.0
    %440 = vmatpush1.msra.mxu0 0.0
    %441 = vmatprep.subr.mxu0 0.0
    %442 = vmatpush1.msra.mxu0 0.0
    %443 = vmatprep.subr.mxu0 0.0
    %444 = vmatpush1.msra.mxu0 0.0
    %445 = vmatprep.subr.mxu0 0.0
    %446 = vmatpush1.msra.mxu0 0.0
    %447 = vmatprep.subr.mxu0 0.0
    %448 = vmatpush1.msra.mxu0 0.0
    %449 = vmatprep.subr.mxu0 0.0
    %450 = vmatpush1.msra.mxu0 0.0
    %451 = vmatprep.subr.mxu0 0.0
    %452 = vmatpush1.msra.mxu0 0.0
    %453 = vmatprep.subr.mxu0 0.0
    %454 = vmatpush1.msra.mxu0 0.0
    %455 = vmatprep.subr.mxu0 0.0
    %456 = vmatpush1.msra.mxu0 0.0
    %457 = vmatprep.subr.mxu0 0.0
    %458 = vmatpush1.msra.mxu0 0.0
    %459 = vmatprep.subr.mxu0 0.0
    %460 = vmatpush1.msra.mxu0 0.0
    %461 = vmatprep.subr.mxu0 0.0
    %462 = vmatpush1.msra.mxu0 0.0
    %463 = vmatprep.subr.mxu0 0.0
    %464 = vmatpush1.msra.mxu0 0.0
    %465 = vmatprep.subr.mxu0 0.0
    %466 = vmatpush1.msra.mxu0 0.0
    %467 = vmatprep.subr.mxu0 0.0
    %468 = vmatpush1.msra.mxu0 0.0
    %469 = vmatprep.subr.mxu0 0.0
    %470 = vmatpush1.msra.mxu0 0.0
    %471 = vmatprep.subr.mxu0 0.0
    %472 = vmatpush1.msra.mxu0 0.0
    %473 = vmatprep.subr.mxu0 0.0
    %474 = vmatpush1.msra.mxu0 0.0
    %475 = vmatprep.subr.mxu0 0.0
    %476 = vmatpush1.msra.mxu0 0.0
    %477 = vmatprep.subr.mxu0 0.0
    %478 = vmatpush1.msra.mxu0 0.0
    %479 = vmatprep.subr.mxu0 0.0
    %480 = vmatpush1.msra.mxu0 0.0
    %481 = vmatprep.subr.mxu0 0.0
    %482 = vmatpush1.msra.mxu0 0.0
    %483 = vmatprep.mubr.f32.mxu0 0.0
    %484 = vmatmul.mubr.f32.gmra.mrb[0].mxu0 %v417
    %v485 = vpop.f32.mrb[0].mxu0
    %v486 = vadd.f32 %v199, %v485
    %v487 = vpop.f32.mrb[0].mxu0
    %488 = vdwg.mxu0
    %v489 = vadd.f32 %v416, %v486
    %v490 = vxor.u32 %v489, 2147483648
    %v491 = vmul.f32 %v490, 1.442695
    %v492 = vpow.pop %v491
    %v493 = vadd.f32 %v492, 1.0
    %v494 = vrcp.pop %v493
    %v495 = vmul.f32 1.0, %v494
    %497 = vrot.lane.b32.xlu0 %v486, 64
    %v498 = vpop.permute.xlu0 %497
    %v500 = vmul.f32 %v495, %v498
    %502 = vrot.lane.b32.xlu0 %v500, 64
    %v503 = vpop.permute.xlu0 %502
    %v505 = vadd.f32 %v416, %v503
    %v506 = vtanh.pop %v505
    %v507 = vsub.f32 1.0, %v495
    %509 = vrot.lane.b32.xlu0 %v506, 96
    %v510 = vpop.permute.xlu0 %509
    %v512 = vmul.f32 %v507, %v510
    %v513 = vmul.f32 %v495, %v408
    %v514 = vadd.f32 %v512, %v513
    %516 = vrot.lane.b32.xlu0 %v514, 96
    %v517 = vpop.permute.xlu0 %516
    %s519 = scalar_lea.vmem [#allocation3], 4
    %520 = vst.msk [vmem:[%s519] sm:$0x3] %vm307, %v517
    %s521 = scalar_lea.vmem [#allocation2], 6
    %v522 = vld [vmem:[%s521] sm:$0x3]
    %v523 = vsel %vm103, %v517, 0
    %525 = vmatprep.subr.mxu0 0.0
    %526 = vmatpush1.msra.mxu0 %v188
    %527 = vmatprep.subr.mxu0 0.0
    %528 = vmatpush1.msra.mxu0 %v189
    %529 = vmatprep.subr.mxu0 0.0
    %530 = vmatpush1.msra.mxu0 %v190
    %531 = vmatprep.subr.mxu0 0.0
    %532 = vmatpush1.msra.mxu0 %v191
    %533 = vmatprep.subr.mxu0 0.0
    %534 = vmatpush1.msra.mxu0 0.0
    %535 = vmatprep.subr.mxu0 0.0
    %536 = vmatpush1.msra.mxu0 0.0
    %537 = vmatprep.subr.mxu0 0.0
    %538 = vmatpush1.msra.mxu0 0.0
    %539 = vmatprep.subr.mxu0 0.0
    %540 = vmatpush1.msra.mxu0 0.0
    %541 = vmatprep.subr.mxu0 0.0
    %542 = vmatpush1.msra.mxu0 0.0
    %543 = vmatprep.subr.mxu0 0.0
    %544 = vmatpush1.msra.mxu0 0.0
    %545 = vmatprep.subr.mxu0 0.0
    %546 = vmatpush1.msra.mxu0 0.0
    %547 = vmatprep.subr.mxu0 0.0
    %548 = vmatpush1.msra.mxu0 0.0
    %549 = vmatprep.subr.mxu0 0.0
    %550 = vmatpush1.msra.mxu0 0.0
    %551 = vmatprep.subr.mxu0 0.0
    %552 = vmatpush1.msra.mxu0 0.0
    %553 = vmatprep.subr.mxu0 0.0
    %554 = vmatpush1.msra.mxu0 0.0
    %555 = vmatprep.subr.mxu0 0.0
    %556 = vmatpush1.msra.mxu0 0.0
    %557 = vmatprep.subr.mxu0 0.0
    %558 = vmatpush1.msra.mxu0 0.0
    %559 = vmatprep.subr.mxu0 0.0
    %560 = vmatpush1.msra.mxu0 0.0
    %561 = vmatprep.subr.mxu0 0.0
    %562 = vmatpush1.msra.mxu0 0.0
    %563 = vmatprep.subr.mxu0 0.0
    %564 = vmatpush1.msra.mxu0 0.0
    %565 = vmatprep.subr.mxu0 0.0
    %566 = vmatpush1.msra.mxu0 0.0
    %567 = vmatprep.subr.mxu0 0.0
    %568 = vmatpush1.msra.mxu0 0.0
    %569 = vmatprep.subr.mxu0 0.0
    %570 = vmatpush1.msra.mxu0 0.0
    %571 = vmatprep.subr.mxu0 0.0
    %572 = vmatpush1.msra.mxu0 0.0
    %573 = vmatprep.subr.mxu0 0.0
    %574 = vmatpush1.msra.mxu0 0.0
    %575 = vmatprep.subr.mxu0 0.0
    %576 = vmatpush1.msra.mxu0 0.0
    %577 = vmatprep.subr.mxu0 0.0
    %578 = vmatpush1.msra.mxu0 0.0
    %579 = vmatprep.subr.mxu0 0.0
    %580 = vmatpush1.msra.mxu0 0.0
    %581 = vmatprep.subr.mxu0 0.0
    %582 = vmatpush1.msra.mxu0 0.0
    %583 = vmatprep.subr.mxu0 0.0
    %584 = vmatpush1.msra.mxu0 0.0
    %585 = vmatprep.subr.mxu0 0.0
    %586 = vmatpush1.msra.mxu0 0.0
    %587 = vmatprep.subr.mxu0 0.0
    %588 = vmatpush1.msra.mxu0 0.0
    %589 = vmatprep.mubr.f32.mxu0 0.0
    %590 = vmatmul.mubr.f32.gmra.mrb[0].mxu0 %v523
    %v591 = vpop.f32.mrb[0].mxu0
    %v592 = vadd.f32 %v199, %v591
    %v593 = vpop.f32.mrb[0].mxu0
    %594 = vdwg.mxu0
    %v595 = vadd.f32 %v522, %v592
    %v596 = vxor.u32 %v595, 2147483648
    %v597 = vmul.f32 %v596, 1.442695
    %v598 = vpow.pop %v597
    %v599 = vadd.f32 %v598, 1.0
    %v600 = vrcp.pop %v599
    %v601 = vmul.f32 1.0, %v600
    %603 = vrot.lane.b32.xlu0 %v592, 64
    %v604 = vpop.permute.xlu0 %603
    %v606 = vmul.f32 %v601, %v604
    %608 = vrot.lane.b32.xlu0 %v606, 64
    %v609 = vpop.permute.xlu0 %608
    %v611 = vadd.f32 %v522, %v609
    %v612 = vtanh.pop %v611
    %v613 = vsub.f32 1.0, %v601
    %615 = vrot.lane.b32.xlu0 %v612, 96
    %v616 = vpop.permute.xlu0 %615
    %v618 = vmul.f32 %v613, %v616
    %v619 = vmul.f32 %v601, %v514
    %v620 = vadd.f32 %v618, %v619
    %622 = vrot.lane.b32.xlu0 %v620, 96
    %v623 = vpop.permute.xlu0 %622
    %s625 = scalar_lea.vmem [#allocation3], 6
    %626 = vst.msk [vmem:[%s625] sm:$0x3] %vm307, %v623
    %s627 = scalar_lea.vmem [#allocation2], 8
    %v628 = vld [vmem:[%s627] sm:$0x3]
    %v629 = vsel %vm103, %v623, 0
    %631 = vmatprep.subr.mxu0 0.0
    %632 = vmatpush1.msra.mxu0 %v188
    %633 = vmatprep.subr.mxu0 0.0
    %634 = vmatpush1.msra.mxu0 %v189
    %635 = vmatprep.subr.mxu0 0.0
    %636 = vmatpush1.msra.mxu0 %v190
    %637 = vmatprep.subr.mxu0 0.0
    %638 = vmatpush1.msra.mxu0 %v191
    %639 = vmatprep.subr.mxu0 0.0
    %640 = vmatpush1.msra.mxu0 0.0
    %641 = vmatprep.subr.mxu0 0.0
    %642 = vmatpush1.msra.mxu0 0.0
    %643 = vmatprep.subr.mxu0 0.0
    %644 = vmatpush1.msra.mxu0 0.0
    %645 = vmatprep.subr.mxu0 0.0
    %646 = vmatpush1.msra.mxu0 0.0
    %647 = vmatprep.subr.mxu0 0.0
    %648 = vmatpush1.msra.mxu0 0.0
    %649 = vmatprep.subr.mxu0 0.0
    %650 = vmatpush1.msra.mxu0 0.0
    %651 = vmatprep.subr.mxu0 0.0
    %652 = vmatpush1.msra.mxu0 0.0
    %653 = vmatprep.subr.mxu0 0.0
    %654 = vmatpush1.msra.mxu0 0.0
    %655 = vmatprep.subr.mxu0 0.0
    %656 = vmatpush1.msra.mxu0 0.0
    %657 = vmatprep.subr.mxu0 0.0
    %658 = vmatpush1.msra.mxu0 0.0
    %659 = vmatprep.subr.mxu0 0.0
    %660 = vmatpush1.msra.mxu0 0.0
    %661 = vmatprep.subr.mxu0 0.0
    %662 = vmatpush1.msra.mxu0 0.0
    %663 = vmatprep.subr.mxu0 0.0
    %664 = vmatpush1.msra.mxu0 0.0
    %665 = vmatprep.subr.mxu0 0.0
    %666 = vmatpush1.msra.mxu0 0.0
    %667 = vmatprep.subr.mxu0 0.0
    %668 = vmatpush1.msra.mxu0 0.0
    %669 = vmatprep.subr.mxu0 0.0
    %670 = vmatpush1.msra.mxu0 0.0
    %671 = vmatprep.subr.mxu0 0.0
    %672 = vmatpush1.msra.mxu0 0.0
    %673 = vmatprep.subr.mxu0 0.0
    %674 = vmatpush1.msra.mxu0 0.0
    %675 = vmatprep.subr.mxu0 0.0
    %676 = vmatpush1.msra.mxu0 0.0
    %677 = vmatprep.subr.mxu0 0.0
    %678 = vmatpush1.msra.mxu0 0.0
    %679 = vmatprep.subr.mxu0 0.0
    %680 = vmatpush1.msra.mxu0 0.0
    %681 = vmatprep.subr.mxu0 0.0
    %682 = vmatpush1.msra.mxu0 0.0
    %683 = vmatprep.subr.mxu0 0.0
    %684 = vmatpush1.msra.mxu0 0.0
    %685 = vmatprep.subr.mxu0 0.0
    %686 = vmatpush1.msra.mxu0 0.0
    %687 = vmatprep.subr.mxu0 0.0
    %688 = vmatpush1.msra.mxu0 0.0
    %689 = vmatprep.subr.mxu0 0.0
    %690 = vmatpush1.msra.mxu0 0.0
    %691 = vmatprep.subr.mxu0 0.0
    %692 = vmatpush1.msra.mxu0 0.0
    %693 = vmatprep.subr.mxu0 0.0
    %694 = vmatpush1.msra.mxu0 0.0
    %695 = vmatprep.mubr.f32.mxu0 0.0
    %696 = vmatmul.mubr.f32.gmra.mrb[0].mxu0 %v629
    %v697 = vpop.f32.mrb[0].mxu0
    %v698 = vadd.f32 %v199, %v697
    %v699 = vpop.f32.mrb[0].mxu0
    %700 = vdwg.mxu0
    %v701 = vadd.f32 %v628, %v698
    %v702 = vxor.u32 %v701, 2147483648
    %v703 = vmul.f32 %v702, 1.442695
    %v704 = vpow.pop %v703
    %v705 = vadd.f32 %v704, 1.0
    %v706 = vrcp.pop %v705
    %v707 = vmul.f32 1.0, %v706
    %709 = vrot.lane.b32.xlu0 %v698, 64
    %v710 = vpop.permute.xlu0 %709
    %v712 = vmul.f32 %v707, %v710
    %714 = vrot.lane.b32.xlu0 %v712, 64
    %v715 = vpop.permute.xlu0 %714
    %v717 = vadd.f32 %v628, %v715
    %v718 = vtanh.pop %v717
    %v719 = vsub.f32 1.0, %v707
    %721 = vrot.lane.b32.xlu0 %v718, 96
    %v722 = vpop.permute.xlu0 %721
    %v724 = vmul.f32 %v719, %v722
    %v725 = vmul.f32 %v707, %v620
    %v726 = vadd.f32 %v724, %v725
    %728 = vrot.lane.b32.xlu0 %v726, 96
    %v729 = vpop.permute.xlu0 %728
    %s731 = scalar_lea.vmem [#allocation3], 8
    %732 = vst.msk [vmem:[%s731] sm:$0x3] %vm307, %v729
    %s733 = scalar_lea.vmem [#allocation2], 10
    %v734 = vld [vmem:[%s733] sm:$0x3]
    %v735 = vsel %vm103, %v729, 0
    %737 = vmatprep.subr.mxu0 0.0
    %738 = vmatpush1.msra.mxu0 %v188
    %739 = vmatprep.subr.mxu0 0.0
    %740 = vmatpush1.msra.mxu0 %v189
    %741 = vmatprep.subr.mxu0 0.0
    %742 = vmatpush1.msra.mxu0 %v190
    %743 = vmatprep.subr.mxu0 0.0
    %744 = vmatpush1.msra.mxu0 %v191
    %745 = vmatprep.subr.mxu0 0.0
    %746 = vmatpush1.msra.mxu0 0.0
    %747 = vmatprep.subr.mxu0 0.0
    %748 = vmatpush1.msra.mxu0 0.0
    %749 = vmatprep.subr.mxu0 0.0
    %750 = vmatpush1.msra.mxu0 0.0
    %751 = vmatprep.subr.mxu0 0.0
    %752 = vmatpush1.msra.mxu0 0.0
    %753 = vmatprep.subr.mxu0 0.0
    %754 = vmatpush1.msra.mxu0 0.0
    %755 = vmatprep.subr.mxu0 0.0
    %756 = vmatpush1.msra.mxu0 0.0
    %757 = vmatprep.subr.mxu0 0.0
    %758 = vmatpush1.msra.mxu0 0.0
    %759 = vmatprep.subr.mxu0 0.0
    %760 = vmatpush1.msra.mxu0 0.0
    %761 = vmatprep.subr.mxu0 0.0
    %762 = vmatpush1.msra.mxu0 0.0
    %763 = vmatprep.subr.mxu0 0.0
    %764 = vmatpush1.msra.mxu0 0.0
    %765 = vmatprep.subr.mxu0 0.0
    %766 = vmatpush1.msra.mxu0 0.0
    %767 = vmatprep.subr.mxu0 0.0
    %768 = vmatpush1.msra.mxu0 0.0
    %769 = vmatprep.subr.mxu0 0.0
    %770 = vmatpush1.msra.mxu0 0.0
    %771 = vmatprep.subr.mxu0 0.0
    %772 = vmatpush1.msra.mxu0 0.0
    %773 = vmatprep.subr.mxu0 0.0
    %774 = vmatpush1.msra.mxu0 0.0
    %775 = vmatprep.subr.mxu0 0.0
    %776 = vmatpush1.msra.mxu0 0.0
    %777 = vmatprep.subr.mxu0 0.0
    %778 = vmatpush1.msra.mxu0 0.0
    %779 = vmatprep.subr.mxu0 0.0
    %780 = vmatpush1.msra.mxu0 0.0
    %781 = vmatprep.subr.mxu0 0.0
    %782 = vmatpush1.msra.mxu0 0.0
    %783 = vmatprep.subr.mxu0 0.0
    %784 = vmatpush1.msra.mxu0 0.0
    %785 = vmatprep.subr.mxu0 0.0
    %786 = vmatpush1.msra.mxu0 0.0
    %787 = vmatprep.subr.mxu0 0.0
    %788 = vmatpush1.msra.mxu0 0.0
    %789 = vmatprep.subr.mxu0 0.0
    %790 = vmatpush1.msra.mxu0 0.0
    %791 = vmatprep.subr.mxu0 0.0
    %792 = vmatpush1.msra.mxu0 0.0
    %793 = vmatprep.subr.mxu0 0.0
    %794 = vmatpush1.msra.mxu0 0.0
    %795 = vmatprep.subr.mxu0 0.0
    %796 = vmatpush1.msra.mxu0 0.0
    %797 = vmatprep.subr.mxu0 0.0
    %798 = vmatpush1.msra.mxu0 0.0
    %799 = vmatprep.subr.mxu0 0.0
    %800 = vmatpush1.msra.mxu0 0.0
    %801 = vmatprep.mubr.f32.mxu0 0.0
    %802 = vmatmul.mubr.f32.gmra.mrb[0].mxu0 %v735
    %v803 = vpop.f32.mrb[0].mxu0
    %v804 = vadd.f32 %v199, %v803
    %v805 = vpop.f32.mrb[0].mxu0
    %806 = vdwg.mxu0
    %v807 = vadd.f32 %v734, %v804
    %v808 = vxor.u32 %v807, 2147483648
    %v809 = vmul.f32 %v808, 1.442695
    %v810 = vpow.pop %v809
    %v811 = vadd.f32 %v810, 1.0
    %v812 = vrcp.pop %v811
    %v813 = vmul.f32 1.0, %v812
    %815 = vrot.lane.b32.xlu0 %v804, 64
    %v816 = vpop.permute.xlu0 %815
    %v818 = vmul.f32 %v813, %v816
    %820 = vrot.lane.b32.xlu0 %v818, 64
    %v821 = vpop.permute.xlu0 %820
    %v823 = vadd.f32 %v734, %v821
    %v824 = vtanh.pop %v823
    %v825 = vsub.f32 1.0, %v813
    %827 = vrot.lane.b32.xlu0 %v824, 96
    %v828 = vpop.permute.xlu0 %827
    %v830 = vmul.f32 %v825, %v828
    %v831 = vmul.f32 %v813, %v726
    %v832 = vadd.f32 %v830, %v831
    %834 = vrot.lane.b32.xlu0 %v832, 96
    %v835 = vpop.permute.xlu0 %834
    %s837 = scalar_lea.vmem [#allocation3], 10
    %838 = vst.msk [vmem:[%s837] sm:$0x3] %vm307, %v835
    %s839 = scalar_lea.vmem [#allocation2], 12
    %v840 = vld [vmem:[%s839] sm:$0x3]
    %v841 = vsel %vm103, %v835, 0
    %843 = vmatprep.subr.mxu0 0.0
    %844 = vmatpush1.msra.mxu0 %v188
    %845 = vmatprep.subr.mxu0 0.0
    %846 = vmatpush1.msra.mxu0 %v189
    %847 = vmatprep.subr.mxu0 0.0
    %848 = vmatpush1.msra.mxu0 %v190
    %849 = vmatprep.subr.mxu0 0.0
    %850 = vmatpush1.msra.mxu0 %v191
    %851 = vmatprep.subr.mxu0 0.0
    %852 = vmatpush1.msra.mxu0 0.0
    %853 = vmatprep.subr.mxu0 0.0
    %854 = vmatpush1.msra.mxu0 0.0
    %855 = vmatprep.subr.mxu0 0.0
    %856 = vmatpush1.msra.mxu0 0.0
    %857 = vmatprep.subr.mxu0 0.0
    %858 = vmatpush1.msra.mxu0 0.0
    %859 = vmatprep.subr.mxu0 0.0
    %860 = vmatpush1.msra.mxu0 0.0
    %861 = vmatprep.subr.mxu0 0.0
    %862 = vmatpush1.msra.mxu0 0.0
    %863 = vmatprep.subr.mxu0 0.0
    %864 = vmatpush1.msra.mxu0 0.0
    %865 = vmatprep.subr.mxu0 0.0
    %866 = vmatpush1.msra.mxu0 0.0
    %867 = vmatprep.subr.mxu0 0.0
    %868 = vmatpush1.msra.mxu0 0.0
    %869 = vmatprep.subr.mxu0 0.0
    %870 = vmatpush1.msra.mxu0 0.0
    %871 = vmatprep.subr.mxu0 0.0
    %872 = vmatpush1.msra.mxu0 0.0
    %873 = vmatprep.subr.mxu0 0.0
    %874 = vmatpush1.msra.mxu0 0.0
    %875 = vmatprep.subr.mxu0 0.0
    %876 = vmatpush1.msra.mxu0 0.0
    %877 = vmatprep.subr.mxu0 0.0
    %878 = vmatpush1.msra.mxu0 0.0
    %879 = vmatprep.subr.mxu0 0.0
    %880 = vmatpush1.msra.mxu0 0.0
    %881 = vmatprep.subr.mxu0 0.0
    %882 = vmatpush1.msra.mxu0 0.0
    %883 = vmatprep.subr.mxu0 0.0
    %884 = vmatpush1.msra.mxu0 0.0
    %885 = vmatprep.subr.mxu0 0.0
    %886 = vmatpush1.msra.mxu0 0.0
    %887 = vmatprep.subr.mxu0 0.0
    %888 = vmatpush1.msra.mxu0 0.0
    %889 = vmatprep.subr.mxu0 0.0
    %890 = vmatpush1.msra.mxu0 0.0
    %891 = vmatprep.subr.mxu0 0.0
    %892 = vmatpush1.msra.mxu0 0.0
    %893 = vmatprep.subr.mxu0 0.0
    %894 = vmatpush1.msra.mxu0 0.0
    %895 = vmatprep.subr.mxu0 0.0
    %896 = vmatpush1.msra.mxu0 0.0
    %897 = vmatprep.subr.mxu0 0.0
    %898 = vmatpush1.msra.mxu0 0.0
    %899 = vmatprep.subr.mxu0 0.0
    %900 = vmatpush1.msra.mxu0 0.0
    %901 = vmatprep.subr.mxu0 0.0
    %902 = vmatpush1.msra.mxu0 0.0
    %903 = vmatprep.subr.mxu0 0.0
    %904 = vmatpush1.msra.mxu0 0.0
    %905 = vmatprep.subr.mxu0 0.0
    %906 = vmatpush1.msra.mxu0 0.0
    %907 = vmatprep.mubr.f32.mxu0 0.0
    %908 = vmatmul.mubr.f32.gmra.mrb[0].mxu0 %v841
    %v909 = vpop.f32.mrb[0].mxu0
    %v910 = vadd.f32 %v199, %v909
    %v911 = vpop.f32.mrb[0].mxu0
    %912 = vdwg.mxu0
    %v913 = vadd.f32 %v840, %v910
    %v914 = vxor.u32 %v913, 2147483648
    %v915 = vmul.f32 %v914, 1.442695
    %v916 = vpow.pop %v915
    %v917 = vadd.f32 %v916, 1.0
    %v918 = vrcp.pop %v917
    %v919 = vmul.f32 1.0, %v918
    %921 = vrot.lane.b32.xlu0 %v910, 64
    %v922 = vpop.permute.xlu0 %921
    %v924 = vmul.f32 %v919, %v922
    %926 = vrot.lane.b32.xlu0 %v924, 64
    %v927 = vpop.permute.xlu0 %926
    %v929 = vadd.f32 %v840, %v927
    %v930 = vtanh.pop %v929
    %v931 = vsub.f32 1.0, %v919
    %933 = vrot.lane.b32.xlu0 %v930, 96
    %v934 = vpop.permute.xlu0 %933
    %v936 = vmul.f32 %v931, %v934
    %v937 = vmul.f32 %v919, %v832
    %v938 = vadd.f32 %v936, %v937
    %940 = vrot.lane.b32.xlu0 %v938, 96
    %v941 = vpop.permute.xlu0 %940
    %s943 = scalar_lea.vmem [#allocation3], 12
    %944 = vst.msk [vmem:[%s943] sm:$0x3] %vm307, %v941
    %s945 = scalar_lea.vmem [#allocation2], 14
    %v946 = vld [vmem:[%s945] sm:$0x3]
    %v947 = vsel %vm103, %v941, 0
    %949 = vmatprep.subr.mxu0 0.0
    %950 = vmatpush1.msra.mxu0 %v188
    %951 = vmatprep.subr.mxu0 0.0
    %952 = vmatpush1.msra.mxu0 %v189
    %953 = vmatprep.subr.mxu0 0.0
    %954 = vmatpush1.msra.mxu0 %v190
    %955 = vmatprep.subr.mxu0 0.0
    %956 = vmatpush1.msra.mxu0 %v191
    %957 = vmatprep.subr.mxu0 0.0
    %958 = vmatpush1.msra.mxu0 0.0
    %959 = vmatprep.subr.mxu0 0.0
    %960 = vmatpush1.msra.mxu0 0.0
    %961 = vmatprep.subr.mxu0 0.0
    %962 = vmatpush1.msra.mxu0 0.0
    %963 = vmatprep.subr.mxu0 0.0
    %964 = vmatpush1.msra.mxu0 0.0
    %965 = vmatprep.subr.mxu0 0.0
    %966 = vmatpush1.msra.mxu0 0.0
    %967 = vmatprep.subr.mxu0 0.0
    %968 = vmatpush1.msra.mxu0 0.0
    %969 = vmatprep.subr.mxu0 0.0
    %970 = vmatpush1.msra.mxu0 0.0
    %971 = vmatprep.subr.mxu0 0.0
    %972 = vmatpush1.msra.mxu0 0.0
    %973 = vmatprep.subr.mxu0 0.0
    %974 = vmatpush1.msra.mxu0 0.0
    %975 = vmatprep.subr.mxu0 0.0
    %976 = vmatpush1.msra.mxu0 0.0
    %977 = vmatprep.subr.mxu0 0.0
    %978 = vmatpush1.msra.mxu0 0.0
    %979 = vmatprep.subr.mxu0 0.0
    %980 = vmatpush1.msra.mxu0 0.0
    %981 = vmatprep.subr.mxu0 0.0
    %982 = vmatpush1.msra.mxu0 0.0
    %983 = vmatprep.subr.mxu0 0.0
    %984 = vmatpush1.msra.mxu0 0.0
    %985 = vmatprep.subr.mxu0 0.0
    %986 = vmatpush1.msra.mxu0 0.0
    %987 = vmatprep.subr.mxu0 0.0
    %988 = vmatpush1.msra.mxu0 0.0
    %989 = vmatprep.subr.mxu0 0.0
    %990 = vmatpush1.msra.mxu0 0.0
    %991 = vmatprep.subr.mxu0 0.0
    %992 = vmatpush1.msra.mxu0 0.0
    %993 = vmatprep.subr.mxu0 0.0
    %994 = vmatpush1.msra.mxu0 0.0
    %995 = vmatprep.subr.mxu0 0.0
    %996 = vmatpush1.msra.mxu0 0.0
    %997 = vmatprep.subr.mxu0 0.0
    %998 = vmatpush1.msra.mxu0 0.0
    %999 = vmatprep.subr.mxu0 0.0
    %1000 = vmatpush1.msra.mxu0 0.0
    %1001 = vmatprep.subr.mxu0 0.0
    %1002 = vmatpush1.msra.mxu0 0.0
    %1003 = vmatprep.subr.mxu0 0.0
    %1004 = vmatpush1.msra.mxu0 0.0
    %1005 = vmatprep.subr.mxu0 0.0
    %1006 = vmatpush1.msra.mxu0 0.0
    %1007 = vmatprep.subr.mxu0 0.0
    %1008 = vmatpush1.msra.mxu0 0.0
    %1009 = vmatprep.subr.mxu0 0.0
    %1010 = vmatpush1.msra.mxu0 0.0
    %1011 = vmatprep.subr.mxu0 0.0
    %1012 = vmatpush1.msra.mxu0 0.0
    %1013 = vmatprep.mubr.f32.mxu0 0.0
    %1014 = vmatmul.mubr.f32.gmra.mrb[0].mxu0 %v947
    %v1015 = vpop.f32.mrb[0].mxu0
    %v1016 = vadd.f32 %v199, %v1015
    %v1017 = vpop.f32.mrb[0].mxu0
    %1018 = vdwg.mxu0
    %v1019 = vadd.f32 %v946, %v1016
    %v1020 = vxor.u32 %v1019, 2147483648
    %v1021 = vmul.f32 %v1020, 1.442695
    %v1022 = vpow.pop %v1021
    %v1023 = vadd.f32 %v1022, 1.0
    %v1024 = vrcp.pop %v1023
    %v1025 = vmul.f32 1.0, %v1024
    %1027 = vrot.lane.b32.xlu0 %v1016, 64
    %v1028 = vpop.permute.xlu0 %1027
    %v1030 = vmul.f32 %v1025, %v1028
    %1032 = vrot.lane.b32.xlu0 %v1030, 64
    %v1033 = vpop.permute.xlu0 %1032
    %v1035 = vadd.f32 %v946, %v1033
    %v1036 = vtanh.pop %v1035
    %v1037 = vsub.f32 1.0, %v1025
    %1039 = vrot.lane.b32.xlu0 %v1036, 96
    %v1040 = vpop.permute.xlu0 %1039
    %v1042 = vmul.f32 %v1037, %v1040
    %v1043 = vmul.f32 %v1025, %v938
    %v1044 = vadd.f32 %v1042, %v1043
    %1046 = vrot.lane.b32.xlu0 %v1044, 96
    %v1047 = vpop.permute.xlu0 %1046
    %s1049 = scalar_lea.vmem [#allocation3], 14
    %1050 = vst.msk [vmem:[%s1049] sm:$0x3] %vm307, %v1047
    %1051 = vst.msk [vmem:[#allocation13] sm:$0x3] %vm307, %v1047
    %v1052 = vld [vmem:[#allocation3] sm:$0xff]
    %v1053 = vld [vmem:[#allocation3 + $0x8] sm:$0xff]
    %v1054 = vld [vmem:[#allocation10] sm:$0xff]
    %v1055 = vld [vmem:[#allocation10 + $0x8] sm:$0xff]
    %v1056 = vld [vmem:[#allocation10 + $0x10] sm:$0xff]
    %v1057 = vld [vmem:[#allocation10 + $0x18] sm:$0xff]
    %v1058 = vld [vmem:[%s7] sm:$0x1]
    %v1060 = vlaneseq
    %v1061 = vshrl.u32 %v1060, 7
    %v1062 = vsub.s32 0, %v1061
    %v1063 = vrot.slane %v1058, %v1062
    %v1066 = vsel %vm103, %v1052, 0
    %v1069 = vsel %vm103, %v1053, 0
    %1071 = vmatprep.subr.mxu0 0.0
    %1072 = vmatpush1.msra.mxu0 %v1054
    %1073 = vmatprep.subr.mxu0 0.0
    %1074 = vmatpush1.msra.mxu0 %v1055
    %1075 = vmatprep.subr.mxu0 0.0
    %1076 = vmatpush1.msra.mxu0 %v1056
    %1077 = vmatprep.subr.mxu0 0.0
    %1078 = vmatpush1.msra.mxu0 %v1057
    %1079 = vmatprep.subr.mxu0 0.0
    %1080 = vmatpush1.msra.mxu0 0.0
    %1081 = vmatprep.subr.mxu0 0.0
    %1082 = vmatpush1.msra.mxu0 0.0
    %1083 = vmatprep.subr.mxu0 0.0
    %1084 = vmatpush1.msra.mxu0 0.0
    %1085 = vmatprep.subr.mxu0 0.0
    %1086 = vmatpush1.msra.mxu0 0.0
    %1087 = vmatprep.subr.mxu0 0.0
    %1088 = vmatpush1.msra.mxu0 0.0
    %1089 = vmatprep.subr.mxu0 0.0
    %1090 = vmatpush1.msra.mxu0 0.0
    %1091 = vmatprep.subr.mxu0 0.0
    %1092 = vmatpush1.msra.mxu0 0.0
    %1093 = vmatprep.subr.mxu0 0.0
    %1094 = vmatpush1.msra.mxu0 0.0
    %1095 = vmatprep.subr.mxu0 0.0
    %1096 = vmatpush1.msra.mxu0 0.0
    %1097 = vmatprep.subr.mxu0 0.0
    %1098 = vmatpush1.msra.mxu0 0.0
    %1099 = vmatprep.subr.mxu0 0.0
    %1100 = vmatpush1.msra.mxu0 0.0
    %1101 = vmatprep.subr.mxu0 0.0
    %1102 = vmatpush1.msra.mxu0 0.0
    %1103 = vmatprep.subr.mxu0 0.0
    %1104 = vmatpush1.msra.mxu0 0.0
    %1105 = vmatprep.subr.mxu0 0.0
    %1106 = vmatpush1.msra.mxu0 0.0
    %1107 = vmatprep.subr.mxu0 0.0
    %1108 = vmatpush1.msra.mxu0 0.0
    %1109 = vmatprep.subr.mxu0 0.0
    %1110 = vmatpush1.msra.mxu0 0.0
    %1111 = vmatprep.subr.mxu0 0.0
    %1112 = vmatpush1.msra.mxu0 0.0
    %1113 = vmatprep.subr.mxu0 0.0
    %1114 = vmatpush1.msra.mxu0 0.0
    %1115 = vmatprep.subr.mxu0 0.0
    %1116 = vmatpush1.msra.mxu0 0.0
    %1117 = vmatprep.subr.mxu0 0.0
    %1118 = vmatpush1.msra.mxu0 0.0
    %1119 = vmatprep.subr.mxu0 0.0
    %1120 = vmatpush1.msra.mxu0 0.0
    %1121 = vmatprep.subr.mxu0 0.0
    %1122 = vmatpush1.msra.mxu0 0.0
    %1123 = vmatprep.subr.mxu0 0.0
    %1124 = vmatpush1.msra.mxu0 0.0
    %1125 = vmatprep.subr.mxu0 0.0
    %1126 = vmatpush1.msra.mxu0 0.0
    %1127 = vmatprep.subr.mxu0 0.0
    %1128 = vmatpush1.msra.mxu0 0.0
    %1129 = vmatprep.subr.mxu0 0.0
    %1130 = vmatpush1.msra.mxu0 0.0
    %1131 = vmatprep.subr.mxu0 0.0
    %1132 = vmatpush1.msra.mxu0 0.0
    %1133 = vmatprep.subr.mxu0 0.0
    %1134 = vmatpush1.msra.mxu0 0.0
    %1135 = vmatprep.mubr.f32.mxu0 0.0
    %1136 = vmatmul.mubr.f32.gmra.mrb[0].mxu0 %v1066
    %v1137 = vpop.f32.mrb[0].mxu0
    %v1138 = vadd.f32 %v1063, %v1137
    %v1139 = vpop.f32.mrb[0].mxu0
    %1140 = vmatprep.mubr.f32.mxu0 0.0
    %1141 = vmatmul.mubr.f32.gmra.mrb[0].mxu0 %v1069
    %v1142 = vpop.f32.mrb[0].mxu0
    %v1143 = vadd.f32 %v1063, %v1142
    %v1144 = vpop.f32.mrb[0].mxu0
    %1145 = vdwg.mxu0
    %1146 = vmax.xlane.f32.xlu0 %v1138
    %v1147 = vpop.xlane.xlu0 %1146
    %1148 = vmax.xlane.f32.xlu0 %v1143
    %v1149 = vpop.xlane.xlu0 %1148
    %v1150 = vsub.f32 %v1138, %v1147
    %v1151 = vsub.f32 %v1143, %v1149
    %v1152 = vmul.f32 %v1150, 1.442695
    %v1153 = vpow.pop %v1152
    %v1154 = vmul.f32 %v1151, 1.442695
    %v1155 = vpow.pop %v1154
    %1156 = vadd.xlane.f32.xlu0 %v1153
    %v1157 = vpop.xlane.xlu0 %1156
    %1158 = vadd.xlane.f32.xlu0 %v1155
    %v1159 = vpop.xlane.xlu0 %1158
    %v1160 = vlog2.pop %v1157
    %v1161 = vmul.f32 %v1160, 0.6931472
    %v1162 = vlog2.pop %v1159
    %v1163 = vmul.f32 %v1162, 0.6931472
    %v1164 = vadd.f32 %v1161, %v1147
    %v1165 = vadd.f32 %v1163, %v1149
    %v1166 = vsub.f32 %v1138, %v1164
    %v1167 = vsub.f32 %v1143, %v1165
    %1168 = vst [vmem:[#allocation12] sm:$0xff] %v1166
    %1169 = vst [vmem:[#allocation12 + $0x8] sm:$0xff] %v1167
    // Predicated region
    $region50: #{tpu_custom_call.1} parent=1 // pred_check
      _
    $region51: #{tpu_custom_call.1} parent=1 // pred_check_branch
      %1171 = sbr.rel (0) target = $region53
    $region52: #{tpu_custom_call.1} parent=1 // pred_region
      %s1173 = ssub.s32 256, 256
      %1174 = vsyncadd [#allocation6], %s1173
      %s1175 = sshll.u32 [#allocation12], 4
      %s1176 = int_to_ptr.vmem [resolvable:$true] %s1175
      %1181 = dma.vmem_to_hbm [thread:$0]  %s1176, 256, %s8, [#allocation6], 128, 128, 8
    $region53: #{tpu_custom_call.1} parent=1 // pred_fallthru
      _
    // Predicated region
    $region54: #{tpu_custom_call.1} parent=1 // pred_check
      _
    $region55: #{tpu_custom_call.1} parent=1 // pred_check_branch
      %1183 = sbr.rel (0) target = $region57
    $region56: #{tpu_custom_call.1} parent=1 // pred_region
      %s1185 = ssub.s32 32, 32
      %1186 = vsyncadd [#allocation14], %s1185
      %s1188 = sshll.u32 [#allocation13], 4
      %s1189 = int_to_ptr.vmem [resolvable:$true] %s1188
      %1191 = dma.vmem_to_hbm [thread:$0]  %s1189, 32, %s9, [#allocation14]
    $region57: #{tpu_custom_call.1} parent=1 // pred_fallthru
      _
    // Predicated region
    $region58: #{tpu_custom_call.1} parent=1 // pred_check
      _
    $region59: #{tpu_custom_call.1} parent=1 // pred_check_branch
      %1193 = sbr.rel (0) target = $region61
    $region60: #{tpu_custom_call.1} parent=1 // pred_region
      %1194 = dma.done [#allocation6], 256
    $region61: #{tpu_custom_call.1} parent=1 // pred_fallthru
      _
    // Predicated region
    $region62: #{tpu_custom_call.1} parent=1 // pred_check
      _
    $region63: #{tpu_custom_call.1} parent=1 // pred_check_branch
      %1196 = sbr.rel (0) target = $region65
    $region64: #{tpu_custom_call.1} parent=1 // pred_region
      %1197 = dma.done [#allocation14], 32
    $region65: #{tpu_custom_call.1} parent=1 // pred_fallthru
      _
    %1198 = vsyncpa [#allocation5], 1
    %1199 = vsyncpa [#allocation8], 1
    %1200 = vsyncpa [#allocation11], 1
    %1201 = vsyncpa [#allocation6], 1
    %1202 = vsyncpa [#allocation14], 1

</llo_original>
